<compile_context>
chip_gen: v7x
topology: tpu7x:2x2x1
jax: 0.10.0
libtpu: 0.0.40
codegen_flags: <defaults>
</compile_context>

<pallas_src>
import functools

import jax
import jax.numpy as jnp
from jax.experimental import pallas as pl
from jax.experimental.pallas import tpu as pltpu

HIDDEN = 768       # BERT pooled-output width
MID = 512          # first Linear out
OUT_DIM = 2        # classifier output
OUT_PAD = 128      # lane-dense padded output width (multiple of 128)
DROPOUT_P = 0.5


def _round_up(x, m):
    return (x + m - 1) // m * m


def _head_kernel(*refs, apply_dropout: bool):
    """Fused: [dropout] -> x@W1+b1 -> ReLU -> h@W2+b2 (lane-padded output)."""
    if apply_dropout:
        x_ref, mask_ref, w1_ref, b1_ref, w2_ref, b2_ref, o_ref = refs
    else:
        x_ref, w1_ref, b1_ref, w2_ref, b2_ref, o_ref = refs

    x = x_ref[...]                                  # [TB, 768] bf16
    if apply_dropout:
        x = x * mask_ref[...]                       # inverted-dropout scale (bf16)

    # Linear(768 -> 512) + ReLU : bf16 x bf16 on the MXU, f32 accumulate.
    h = jnp.dot(x, w1_ref[...], preferred_element_type=jnp.float32) + b1_ref[...]
    h = jnp.maximum(h, 0.0)

    # Linear(512 -> OUT_PAD) : pad columns of W2/b2 are zero, so the first
    # OUT_DIM columns are the exact logits.
    o = jnp.dot(h, w2_ref[...], preferred_element_type=jnp.float32) + b2_ref[...]
    o_ref[...] = o.astype(o_ref.dtype)


def bert_classifier_head(pooled, w1, b1, w2, b2, *, key=None,
                         training=False, dropout_p=DROPOUT_P, block_b=512):
    """pooled: [B, 768]. Returns logits [B, OUT_DIM] f32."""
    B = pooled.shape[0]
    apply_dropout = bool(training) and dropout_p > 0.0

    # --- argument prep: bf16 activations/weights, lane-padded classifier ---
    x = pooled.astype(jnp.bfloat16)                                   # [B, 768]
    w1b = w1.astype(jnp.bfloat16)                                     # [768, 512]
    b1r = b1.reshape(1, MID).astype(jnp.float32)                      # [1, 512]
    w2p = jnp.zeros((MID, OUT_PAD), jnp.float32).at[:, :OUT_DIM].set(
        w2.astype(jnp.float32))                                       # [512, 128]
    b2p = jnp.zeros((1, OUT_PAD), jnp.float32).at[:, :OUT_DIM].set(
        b2.astype(jnp.float32))                                       # [1, 128]

    # Batch tiling: pad B to a multiple of 16 (bf16 sublane packing); bound the
    # tile so (x tile + weights + out tile) x double-buffer fits v7x VMEM too.
    tb = min(int(block_b), _round_up(B, 16))
    Bp = _round_up(B, tb)
    if Bp != B:
        x = jnp.pad(x, ((0, Bp - B), (0, 0)))

    args = [x]
    in_specs = [pl.BlockSpec((tb, HIDDEN), lambda i: (i, 0))]

    if apply_dropout:
        if key is None:
            key = jax.random.PRNGKey(0)
        p = float(min(dropout_p, 1.0))
        scale = 0.0 if p >= 1.0 else 1.0 / (1.0 - p)
        keep = jax.random.uniform(key, (B, HIDDEN)) >= p
        mask = keep.astype(jnp.bfloat16) * jnp.bfloat16(scale)        # {0, 1/(1-p)}
        if Bp != B:
            mask = jnp.pad(mask, ((0, Bp - B), (0, 0)))
        args.append(mask)
        in_specs.append(pl.BlockSpec((tb, HIDDEN), lambda i: (i, 0)))

    args += [w1b, b1r, w2p, b2p]
    in_specs += [
        pl.BlockSpec((HIDDEN, MID), lambda i: (0, 0)),    # W1 resident across steps
        pl.BlockSpec((1, MID), lambda i: (0, 0)),         # b1
        pl.BlockSpec((MID, OUT_PAD), lambda i: (0, 0)),   # W2 (zero-padded)
        pl.BlockSpec((1, OUT_PAD), lambda i: (0, 0)),     # b2 (zero-padded)
    ]

    kernel = functools.partial(_head_kernel, apply_dropout=apply_dropout)

    out = pl.pallas_call(
        kernel,
        out_shape=jax.ShapeDtypeStruct((Bp, OUT_PAD), jnp.float32),
        grid=(Bp // tb,),
        in_specs=in_specs,
        out_specs=pl.BlockSpec((tb, OUT_PAD), lambda i: (i, 0)),
        compiler_params=pltpu.CompilerParams(
            dimension_semantics=("parallel",),            # shards batch on v7x's 2 TCs
            vmem_limit_bytes=32 * 1024 * 1024,
        ),
    )(*args)

    return out[:B, :OUT_DIM]


def _reference_head(pooled, w1, b1, w2, b2, mask=None):
    """Plain-JAX reference matching the kernel's bf16 first-matmul inputs."""
    x = pooled.astype(jnp.bfloat16).astype(jnp.float32)
    if mask is not None:
        x = x * mask.astype(jnp.float32)
    w1f = w1.astype(jnp.bfloat16).astype(jnp.float32)
    h = jnp.maximum(x @ w1f + b1, 0.0)
    return h @ w2 + b2


if __name__ == "__main__":
    key = jax.random.PRNGKey(0)
    k_ids, k_pool, k_w1, k_b1, k_w2, k_b2, k_drop = jax.random.split(key, 7)

    B, SEQ = 8, 16
    # Signature-parity inputs (consumed by the frozen BERT black box; only the
    # batch size matters here since the encoder itself is not translated).
    input_id = jax.random.randint(k_ids, (B, SEQ), 0, 30522, dtype=jnp.int32)
    attn_mask = jnp.ones((B, SEQ), dtype=jnp.int32)
    del input_id, attn_mask

    # Deterministic surrogate for BERT's pooled_output [B, 768].
    pooled = jax.random.normal(k_pool, (B, HIDDEN), dtype=jnp.float32)

    # Deterministic classifier-head parameters (PyTorch-like init scale).
    lim1 = 1.0 / (HIDDEN ** 0.5)
    lim2 = 1.0 / (MID ** 0.5)
    w1 = jax.random.uniform(k_w1, (HIDDEN, MID), jnp.float32, -lim1, lim1)
    b1 = jax.random.uniform(k_b1, (MID,), jnp.float32, -lim1, lim1)
    w2 = jax.random.uniform(k_w2, (MID, OUT_DIM), jnp.float32, -lim2, lim2)
    b2 = jax.random.uniform(k_b2, (OUT_DIM,), jnp.float32, -lim2, lim2)

    # Eval mode (module.eval(): dropout = identity).
    logits = jax.block_until_ready(
        bert_classifier_head(pooled, w1, b1, w2, b2, training=False))
    ref = _reference_head(pooled, w1, b1, w2, b2)
    assert logits.shape == (B, OUT_DIM)
    assert jnp.allclose(logits, ref, atol=1e-3, rtol=1e-3), "eval mismatch vs reference"

    # Training mode (host-generated inverted-dropout mask).
    logits_tr = jax.block_until_ready(
        bert_classifier_head(pooled, w1, b1, w2, b2, key=k_drop, training=True))
    keep = jax.random.uniform(k_drop, (B, HIDDEN)) >= DROPOUT_P
    mask_ref = keep.astype(jnp.float32) * (1.0 / (1.0 - DROPOUT_P))
    ref_tr = _reference_head(pooled, w1, b1, w2, b2, mask=mask_ref)
    assert logits_tr.shape == (B, OUT_DIM)
    assert jnp.allclose(logits_tr, ref_tr, atol=1e-3, rtol=1e-3), "train mismatch vs reference"

    print("KERNEL_OK")
</pallas_src>

<mosaic_0001>
module attributes {stable_mosaic.version = 11 : i64} {
  func.func @_head_kernel(%arg0: i32, %arg1: memref<16x768xbf16, #tpu.memory_space<vmem>>, %arg2: memref<768x512xbf16, #tpu.memory_space<vmem>>, %arg3: memref<1x512xf32, #tpu.memory_space<vmem>>, %arg4: memref<512x128xf32, #tpu.memory_space<vmem>>, %arg5: memref<1x128xf32, #tpu.memory_space<vmem>>, %arg6: memref<16x128xf32, #tpu.memory_space<vmem>>) attributes {dimension_semantics = [#tpu.dimension_semantics<parallel>], iteration_bounds = array<i64: 1>, scalar_prefetch = 0 : i64, scratch_operands = 0 : i64, tpu.core_type = #tpu.core_type<tc>, window_params = [{transform_indices = @transform_0, window_bounds = array<i64: 16, 768>}, {pipeline_mode = #tpu.pipeline_mode<synchronous>, transform_indices = @transform_1, window_bounds = array<i64: 768, 512>}, {pipeline_mode = #tpu.pipeline_mode<synchronous>, transform_indices = @transform_2, window_bounds = array<i64: 1, 512>}, {pipeline_mode = #tpu.pipeline_mode<synchronous>, transform_indices = @transform_3, window_bounds = array<i64: 512, 128>}, {pipeline_mode = #tpu.pipeline_mode<synchronous>, transform_indices = @transform_4, window_bounds = array<i64: 1, 128>}, {transform_indices = @transform_5, window_bounds = array<i64: 16, 128>}]} {
    %c0 = arith.constant 0 : index
    %c0_0 = arith.constant 0 : index
    %0 = vector.load %arg1[%c0, %c0_0] : memref<16x768xbf16, #tpu.memory_space<vmem>>, vector<16x768xbf16>
    %c0_1 = arith.constant 0 : index
    %c0_2 = arith.constant 0 : index
    %1 = vector.load %arg2[%c0_1, %c0_2] : memref<768x512xbf16, #tpu.memory_space<vmem>>, vector<768x512xbf16>
    %cst = arith.constant dense<0.000000e+00> : vector<16x512xf32>
    %2 = tpu.matmul %0, %1, %cst {dimension_numbers = #tpu.dot_dimension_numbers<[1], [0], [0], [1], [0, 0, 1, 1], [], []>} : vector<16x768xbf16>, vector<768x512xbf16>, vector<16x512xf32> -> vector<16x512xf32>
    %c0_3 = arith.constant 0 : index
    %c0_4 = arith.constant 0 : index
    %3 = vector.load %arg3[%c0_3, %c0_4] : memref<1x512xf32, #tpu.memory_space<vmem>>, vector<1x512xf32>
    %4 = vector.broadcast %3 : vector<1x512xf32> to vector<16x512xf32>
    %5 = arith.addf %2, %4 : vector<16x512xf32>
    %cst_5 = arith.constant 0.000000e+00 : f32
    %6 = vector.broadcast %cst_5 : f32 to vector<16x512xf32>
    %7 = arith.maximumf %5, %6 : vector<16x512xf32>
    %c0_6 = arith.constant 0 : index
    %c0_7 = arith.constant 0 : index
    %8 = vector.load %arg4[%c0_6, %c0_7] : memref<512x128xf32, #tpu.memory_space<vmem>>, vector<512x128xf32>
    %cst_8 = arith.constant dense<0.000000e+00> : vector<16x128xf32>
    %9 = tpu.matmul %7, %8, %cst_8 {dimension_numbers = #tpu.dot_dimension_numbers<[1], [0], [0], [1], [0, 0, 1, 1], [], []>} : vector<16x512xf32>, vector<512x128xf32>, vector<16x128xf32> -> vector<16x128xf32>
    %c0_9 = arith.constant 0 : index
    %c0_10 = arith.constant 0 : index
    %10 = vector.load %arg5[%c0_9, %c0_10] : memref<1x128xf32, #tpu.memory_space<vmem>>, vector<1x128xf32>
    %11 = vector.broadcast %10 : vector<1x128xf32> to vector<16x128xf32>
    %12 = arith.addf %9, %11 : vector<16x128xf32>
    %c0_11 = arith.constant 0 : index
    %c0_12 = arith.constant 0 : index
    %13 = vector.load %arg6[%c0_11, %c0_12] : memref<16x128xf32, #tpu.memory_space<vmem>>, vector<16x128xf32>
    tpu.vector_store %arg6[%c0_11, %c0_12], %12 {strides = array<i32>} : memref<16x128xf32, #tpu.memory_space<vmem>>, vector<16x128xf32>,
    return
  }
  func.func @transform_0(%arg0: i32) -> (i32, i32) {
    %c0_i32 = arith.constant 0 : i32
    %c0_i32_0 = arith.constant 0 : i32
    return %arg0, %c0_i32 : i32, i32
  }
  func.func @transform_1(%arg0: i32) -> (i32, i32) {
    %c0_i32 = arith.constant 0 : i32
    %c0_i32_0 = arith.constant 0 : i32
    %c0_i32_1 = arith.constant 0 : i32
    return %c0_i32, %c0_i32_0 : i32, i32
  }
  func.func @transform_2(%arg0: i32) -> (i32, i32) {
    %c0_i32 = arith.constant 0 : i32
    %c0_i32_0 = arith.constant 0 : i32
    %c0_i32_1 = arith.constant 0 : i32
    return %c0_i32, %c0_i32_0 : i32, i32
  }
  func.func @transform_3(%arg0: i32) -> (i32, i32) {
    %c0_i32 = arith.constant 0 : i32
    %c0_i32_0 = arith.constant 0 : i32
    %c0_i32_1 = arith.constant 0 : i32
    return %c0_i32, %c0_i32_0 : i32, i32
  }
  func.func @transform_4(%arg0: i32) -> (i32, i32) {
    %c0_i32 = arith.constant 0 : i32
    %c0_i32_0 = arith.constant 0 : i32
    %c0_i32_1 = arith.constant 0 : i32
    return %c0_i32, %c0_i32_0 : i32, i32
  }
  func.func @transform_5(%arg0: i32) -> (i32, i32) {
    %c0_i32 = arith.constant 0 : i32
    %c0_i32_0 = arith.constant 0 : i32
    return %arg0, %c0_i32 : i32, i32
  }
}

</mosaic_0001>

<llo_original>
// kernel: tpu_custom_call.1
$region0: #{tpu_custom_call.1}
  #allocation0 [shape = 'u32[]', space=smem, size = 0x4, offset = 0x4, fixed_abs, tag = 'smem constant byte address 0x4 - core index']
  #allocation1 [shape = 'u32[144,128]{1,0:T(1,128)}', space=vmem, size = 0x12000, scoped, tag = 'internal scratch']
  %s0 = inlined_call_operand.hbm [shape: bf16[16,768], index: 0, kind: input, shape index: {}]
  %s1 = inlined_call_operand.hbm [shape: bf16[768,512], index: 1, kind: input, shape index: {}]
  %s2 = inlined_call_operand.vmem [shape: f32[1,512], index: 2, kind: input, shape index: {}]
  %s3 = inlined_call_operand.hbm [shape: f32[512,128], index: 3, kind: input, shape index: {}]
  %s4 = inlined_call_operand.vmem [shape: f32[1,128], index: 4, kind: input, shape index: {}]
  %s5 = inlined_call_operand.hbm [shape: f32[16,128], index: 5, kind: output, shape index: {}]
  %s6 = sld [smem:[#allocation0]]
  $region42: #{tpu_custom_call.1} parent=0
    _
  %s8 = ssub.s32 1, %s6
  %s9 = scalar_select 0, %s8, %s6
  $region1: #{tpu_custom_call.1} parent=0
    #allocation2 [shape = 'u8[24576]{0}', space=vmem, size = 0x6000, scoped, tag = 'input window, operand 0, single buffered']
    #allocation3 [shape = 's32[1]{0}', space=sflag, size = 0x4, scoped, tag = 'scoped memory for tpu_custom_call.1']
    #allocation4 [shape = 's32[1]{0}', space=sflag, size = 0x4, scoped, tag = 'scoped memory for tpu_custom_call.1']
    #allocation5 [shape = 'u8[786432]{0}', space=vmem, size = 0xc0000, scoped, tag = 'input window, operand 1, single buffered']
    #allocation6 [shape = 's32[1]{0}', space=sflag, size = 0x4, scoped, tag = 'scoped memory for tpu_custom_call.1']
    #allocation7 [shape = 'u8[262144]{0}', space=vmem, size = 0x40000, scoped, tag = 'input window, operand 3, single buffered']
    #allocation8 [shape = 'u8[8192]{0}', space=vmem, size = 0x2000, scoped, tag = 'output window, operand 0, single buffered']
    %10 = vsyncpa [#allocation3], 0
    %11 = vsyncpa [#allocation6], 0
    %12 = vsyncpa [#allocation4], 0
    // Predicated region
    $region2: #{tpu_custom_call.1} parent=1 // pred_check
      _
    $region3: #{tpu_custom_call.1} parent=1 // pred_check_branch
      %14 = sbr.rel (0) target = $region5
    $region4: #{tpu_custom_call.1} parent=1 // pred_region
      %s16 = ssub.s32 768, 768
      %17 = vsyncadd [#allocation3], %s16
      %s18 = sshll.u32 [#allocation2], 4
      %s19 = int_to_ptr.vmem [resolvable:$true] %s18
      %24 = dma.hbm_to_vmem [thread:$0]  %s0, 768, %s19, [#allocation3], 384, 384, 24
    $region5: #{tpu_custom_call.1} parent=1 // pred_fallthru
      _
    // Predicated region
    $region6: #{tpu_custom_call.1} parent=1 // pred_check
      _
    $region7: #{tpu_custom_call.1} parent=1 // pred_check_branch
      %26 = sbr.rel (0) target = $region9
    $region8: #{tpu_custom_call.1} parent=1 // pred_region
      %s28 = ssub.s32 24576, 24576
      %29 = vsyncadd [#allocation6], %s28
      %s30 = sshll.u32 [#allocation5], 4
      %s31 = int_to_ptr.vmem [resolvable:$true] %s30
      %36 = dma.hbm_to_vmem [thread:$0]  %s1, 24576, %s31, [#allocation6], 256, 256, 16
    $region9: #{tpu_custom_call.1} parent=1 // pred_fallthru
      _
    // Predicated region
    $region10: #{tpu_custom_call.1} parent=1 // pred_check
      _
    $region11: #{tpu_custom_call.1} parent=1 // pred_check_branch
      %38 = sbr.rel (0) target = $region13
    $region12: #{tpu_custom_call.1} parent=1 // pred_region
      _
    $region13: #{tpu_custom_call.1} parent=1 // pred_fallthru
      _
    // Predicated region
    $region14: #{tpu_custom_call.1} parent=1 // pred_check
      _
    $region15: #{tpu_custom_call.1} parent=1 // pred_check_branch
      %40 = sbr.rel (0) target = $region17
    $region16: #{tpu_custom_call.1} parent=1 // pred_region
      %s42 = ssub.s32 8192, 8192
      %43 = vsyncadd [#allocation6], %s42
      %s44 = sshll.u32 [#allocation7], 4
      %s45 = int_to_ptr.vmem [resolvable:$true] %s44
      %50 = dma.hbm_to_vmem [thread:$0]  %s3, 8192, %s45, [#allocation6], 128, 128, 8
    $region17: #{tpu_custom_call.1} parent=1 // pred_fallthru
      _
    // Predicated region
    $region18: #{tpu_custom_call.1} parent=1 // pred_check
      _
    $region19: #{tpu_custom_call.1} parent=1 // pred_check_branch
      %52 = sbr.rel (0) target = $region21
    $region20: #{tpu_custom_call.1} parent=1 // pred_region
      _
    $region21: #{tpu_custom_call.1} parent=1 // pred_fallthru
      _
    // Predicated region
    $region22: #{tpu_custom_call.1} parent=1 // pred_check
      _
    $region23: #{tpu_custom_call.1} parent=1 // pred_check_branch
      %54 = sbr.rel (0) target = $region25
    $region24: #{tpu_custom_call.1} parent=1 // pred_region
      %55 = dma.done [#allocation3], 768
    $region25: #{tpu_custom_call.1} parent=1 // pred_fallthru
      _
    // Predicated region
    $region26: #{tpu_custom_call.1} parent=1 // pred_check
      _
    $region27: #{tpu_custom_call.1} parent=1 // pred_check_branch
      %57 = sbr.rel (0) target = $region29
    $region28: #{tpu_custom_call.1} parent=1 // pred_region
      %58 = dma.done [#allocation6], 24576
    $region29: #{tpu_custom_call.1} parent=1 // pred_fallthru
      _
    // Predicated region
    $region30: #{tpu_custom_call.1} parent=1 // pred_check
      _
    $region31: #{tpu_custom_call.1} parent=1 // pred_check_branch
      %60 = sbr.rel (0) target = $region33
    $region32: #{tpu_custom_call.1} parent=1 // pred_region
      %61 = dma.done [#allocation6], 8192
    $region33: #{tpu_custom_call.1} parent=1 // pred_fallthru
      _
    %v62 = vld [vmem:[#allocation2] sm:$0xff]
    %v63 = vld [vmem:[#allocation2 + $0x8] sm:$0xff]
    %v64 = vld [vmem:[#allocation2 + $0x10] sm:$0xff]
    %v65 = vld [vmem:[#allocation2 + $0x18] sm:$0xff]
    %v66 = vld [vmem:[#allocation2 + $0x20] sm:$0xff]
    %v67 = vld [vmem:[#allocation2 + $0x28] sm:$0xff]
    %v68 = vld [vmem:[#allocation5] sm:$0xff]
    %v69 = vld [vmem:[#allocation5 + $0x8] sm:$0xff]
    %v70 = vld [vmem:[#allocation5 + $0x10] sm:$0xff]
    %v71 = vld [vmem:[#allocation5 + $0x18] sm:$0xff]
    %v72 = vld [vmem:[#allocation5 + $0x20] sm:$0xff]
    %v73 = vld [vmem:[#allocation5 + $0x28] sm:$0xff]
    %v74 = vld [vmem:[#allocation5 + $0x30] sm:$0xff]
    %v75 = vld [vmem:[#allocation5 + $0x38] sm:$0xff]
    %v76 = vld [vmem:[#allocation5 + $0x40] sm:$0xff]
    %v77 = vld [vmem:[#allocation5 + $0x48] sm:$0xff]
    %v78 = vld [vmem:[#allocation5 + $0x50] sm:$0xff]
    %v79 = vld [vmem:[#allocation5 + $0x58] sm:$0xff]
    %v80 = vld [vmem:[#allocation5 + $0x60] sm:$0xff]
    %v81 = vld [vmem:[#allocation5 + $0x68] sm:$0xff]
    %v82 = vld [vmem:[#allocation5 + $0x70] sm:$0xff]
    %v83 = vld [vmem:[#allocation5 + $0x78] sm:$0xff]
    %v84 = vld [vmem:[#allocation5 + $0x80] sm:$0xff]
    %v85 = vld [vmem:[#allocation5 + $0x88] sm:$0xff]
    %v86 = vld [vmem:[#allocation5 + $0x90] sm:$0xff]
    %v87 = vld [vmem:[#allocation5 + $0x98] sm:$0xff]
    %v88 = vld [vmem:[#allocation5 + $0xa0] sm:$0xff]
    %v89 = vld [vmem:[#allocation5 + $0xa8] sm:$0xff]
    %v90 = vld [vmem:[#allocation5 + $0xb0] sm:$0xff]
    %v91 = vld [vmem:[#allocation5 + $0xb8] sm:$0xff]
    %v92 = vld [vmem:[#allocation5 + $0xc0] sm:$0xff]
    %v93 = vld [vmem:[#allocation5 + $0xc8] sm:$0xff]
    %v94 = vld [vmem:[#allocation5 + $0xd0] sm:$0xff]
    %v95 = vld [vmem:[#allocation5 + $0xd8] sm:$0xff]
    %v96 = vld [vmem:[#allocation5 + $0xe0] sm:$0xff]
    %v97 = vld [vmem:[#allocation5 + $0xe8] sm:$0xff]
    %v98 = vld [vmem:[#allocation5 + $0xf0] sm:$0xff]
    %v99 = vld [vmem:[#allocation5 + $0xf8] sm:$0xff]
    %v100 = vld [vmem:[#allocation5 + $0x100] sm:$0xff]
    %v101 = vld [vmem:[#allocation5 + $0x108] sm:$0xff]
    %v102 = vld [vmem:[#allocation5 + $0x110] sm:$0xff]
    %v103 = vld [vmem:[#allocation5 + $0x118] sm:$0xff]
    %v104 = vld [vmem:[#allocation5 + $0x120] sm:$0xff]
    %v105 = vld [vmem:[#allocation5 + $0x128] sm:$0xff]
    %v106 = vld [vmem:[#allocation5 + $0x130] sm:$0xff]
    %v107 = vld [vmem:[#allocation5 + $0x138] sm:$0xff]
    %v108 = vld [vmem:[#allocation5 + $0x140] sm:$0xff]
    %v109 = vld [vmem:[#allocation5 + $0x148] sm:$0xff]
    %v110 = vld [vmem:[#allocation5 + $0x150] sm:$0xff]
    %v111 = vld [vmem:[#allocation5 + $0x158] sm:$0xff]
    %v112 = vld [vmem:[#allocation5 + $0x160] sm:$0xff]
    %v113 = vld [vmem:[#allocation5 + $0x168] sm:$0xff]
    %v114 = vld [vmem:[#allocation5 + $0x170] sm:$0xff]
    %v115 = vld [vmem:[#allocation5 + $0x178] sm:$0xff]
    %v116 = vld [vmem:[#allocation5 + $0x180] sm:$0xff]
    %v117 = vld [vmem:[#allocation5 + $0x188] sm:$0xff]
    %v118 = vld [vmem:[#allocation5 + $0x190] sm:$0xff]
    %v119 = vld [vmem:[#allocation5 + $0x198] sm:$0xff]
    %v120 = vld [vmem:[#allocation5 + $0x1a0] sm:$0xff]
    %v121 = vld [vmem:[#allocation5 + $0x1a8] sm:$0xff]
    %v122 = vld [vmem:[#allocation5 + $0x1b0] sm:$0xff]
    %v123 = vld [vmem:[#allocation5 + $0x1b8] sm:$0xff]
    %v124 = vld [vmem:[#allocation5 + $0x1c0] sm:$0xff]
    %v125 = vld [vmem:[#allocation5 + $0x1c8] sm:$0xff]
    %v126 = vld [vmem:[#allocation5 + $0x1d0] sm:$0xff]
    %v127 = vld [vmem:[#allocation5 + $0x1d8] sm:$0xff]
    %v128 = vld [vmem:[#allocation5 + $0x1e0] sm:$0xff]
    %v129 = vld [vmem:[#allocation5 + $0x1e8] sm:$0xff]
    %v130 = vld [vmem:[#allocation5 + $0x1f0] sm:$0xff]
    %v131 = vld [vmem:[#allocation5 + $0x1f8] sm:$0xff]
    %v132 = vld [vmem:[#allocation5 + $0x200] sm:$0xff]
    %v133 = vld [vmem:[#allocation5 + $0x208] sm:$0xff]
    %v134 = vld [vmem:[#allocation5 + $0x210] sm:$0xff]
    %v135 = vld [vmem:[#allocation5 + $0x218] sm:$0xff]
    %v136 = vld [vmem:[#allocation5 + $0x220] sm:$0xff]
    %v137 = vld [vmem:[#allocation5 + $0x228] sm:$0xff]
    %v138 = vld [vmem:[#allocation5 + $0x230] sm:$0xff]
    %v139 = vld [vmem:[#allocation5 + $0x238] sm:$0xff]
    %v140 = vld [vmem:[#allocation5 + $0x240] sm:$0xff]
    %v141 = vld [vmem:[#allocation5 + $0x248] sm:$0xff]
    %v142 = vld [vmem:[#allocation5 + $0x250] sm:$0xff]
    %v143 = vld [vmem:[#allocation5 + $0x258] sm:$0xff]
    %v144 = vld [vmem:[#allocation5 + $0x260] sm:$0xff]
    %v145 = vld [vmem:[#allocation5 + $0x268] sm:$0xff]
    %v146 = vld [vmem:[#allocation5 + $0x270] sm:$0xff]
    %v147 = vld [vmem:[#allocation5 + $0x278] sm:$0xff]
    %v148 = vld [vmem:[#allocation5 + $0x280] sm:$0xff]
    %v149 = vld [vmem:[#allocation5 + $0x288] sm:$0xff]
    %v150 = vld [vmem:[#allocation5 + $0x290] sm:$0xff]
    %v151 = vld [vmem:[#allocation5 + $0x298] sm:$0xff]
    %v152 = vld [vmem:[#allocation5 + $0x2a0] sm:$0xff]
    %v153 = vld [vmem:[#allocation5 + $0x2a8] sm:$0xff]
    %v154 = vld [vmem:[#allocation5 + $0x2b0] sm:$0xff]
    %v155 = vld [vmem:[#allocation5 + $0x2b8] sm:$0xff]
    %v156 = vld [vmem:[#allocation5 + $0x2c0] sm:$0xff]
    %v157 = vld [vmem:[#allocation5 + $0x2c8] sm:$0xff]
    %v158 = vld [vmem:[#allocation5 + $0x2d0] sm:$0xff]
    %v159 = vld [vmem:[#allocation5 + $0x2d8] sm:$0xff]
    %v160 = vld [vmem:[#allocation5 + $0x2e0] sm:$0xff]
    %v161 = vld [vmem:[#allocation5 + $0x2e8] sm:$0xff]
    %v162 = vld [vmem:[#allocation5 + $0x2f0] sm:$0xff]
    %v163 = vld [vmem:[#allocation5 + $0x2f8] sm:$0xff]
    %v164 = vld [vmem:[#allocation5 + $0x300] sm:$0xff]
    %v165 = vld [vmem:[#allocation5 + $0x308] sm:$0xff]
    %v166 = vld [vmem:[#allocation5 + $0x310] sm:$0xff]
    %v167 = vld [vmem:[#allocation5 + $0x318] sm:$0xff]
    %v168 = vld [vmem:[#allocation5 + $0x320] sm:$0xff]
    %v169 = vld [vmem:[#allocation5 + $0x328] sm:$0xff]
    %v170 = vld [vmem:[#allocation5 + $0x330] sm:$0xff]
    %v171 = vld [vmem:[#allocation5 + $0x338] sm:$0xff]
    %v172 = vld [vmem:[#allocation5 + $0x340] sm:$0xff]
    %v173 = vld [vmem:[#allocation5 + $0x348] sm:$0xff]
    %v174 = vld [vmem:[#allocation5 + $0x350] sm:$0xff]
    %v175 = vld [vmem:[#allocation5 + $0x358] sm:$0xff]
    %v176 = vld [vmem:[#allocation5 + $0x360] sm:$0xff]
    %v177 = vld [vmem:[#allocation5 + $0x368] sm:$0xff]
    %v178 = vld [vmem:[#allocation5 + $0x370] sm:$0xff]
    %v179 = vld [vmem:[#allocation5 + $0x378] sm:$0xff]
    %v180 = vld [vmem:[#allocation5 + $0x380] sm:$0xff]
    %v181 = vld [vmem:[#allocation5 + $0x388] sm:$0xff]
    %v182 = vld [vmem:[#allocation5 + $0x390] sm:$0xff]
    %v183 = vld [vmem:[#allocation5 + $0x398] sm:$0xff]
    %v184 = vld [vmem:[#allocation5 + $0x3a0] sm:$0xff]
    %v185 = vld [vmem:[#allocation5 + $0x3a8] sm:$0xff]
    %v186 = vld [vmem:[#allocation5 + $0x3b0] sm:$0xff]
    %v187 = vld [vmem:[#allocation5 + $0x3b8] sm:$0xff]
    %v188 = vld [vmem:[#allocation5 + $0x3c0] sm:$0xff]
    %v189 = vld [vmem:[#allocation5 + $0x3c8] sm:$0xff]
    %v190 = vld [vmem:[#allocation5 + $0x3d0] sm:$0xff]
    %v191 = vld [vmem:[#allocation5 + $0x3d8] sm:$0xff]
    %v192 = vld [vmem:[#allocation5 + $0x3e0] sm:$0xff]
    %v193 = vld [vmem:[#allocation5 + $0x3e8] sm:$0xff]
    %v194 = vld [vmem:[#allocation5 + $0x3f0] sm:$0xff]
    %v195 = vld [vmem:[#allocation5 + $0x3f8] sm:$0xff]
    %v196 = vld [vmem:[#allocation5 + $0x400] sm:$0xff]
    %v197 = vld [vmem:[#allocation5 + $0x408] sm:$0xff]
    %v198 = vld [vmem:[#allocation5 + $0x410] sm:$0xff]
    %v199 = vld [vmem:[#allocation5 + $0x418] sm:$0xff]
    %v200 = vld [vmem:[#allocation5 + $0x420] sm:$0xff]
    %v201 = vld [vmem:[#allocation5 + $0x428] sm:$0xff]
    %v202 = vld [vmem:[#allocation5 + $0x430] sm:$0xff]
    %v203 = vld [vmem:[#allocation5 + $0x438] sm:$0xff]
    %v204 = vld [vmem:[#allocation5 + $0x440] sm:$0xff]
    %v205 = vld [vmem:[#allocation5 + $0x448] sm:$0xff]
    %v206 = vld [vmem:[#allocation5 + $0x450] sm:$0xff]
    %v207 = vld [vmem:[#allocation5 + $0x458] sm:$0xff]
    %v208 = vld [vmem:[#allocation5 + $0x460] sm:$0xff]
    %v209 = vld [vmem:[#allocation5 + $0x468] sm:$0xff]
    %v210 = vld [vmem:[#allocation5 + $0x470] sm:$0xff]
    %v211 = vld [vmem:[#allocation5 + $0x478] sm:$0xff]
    %v212 = vld [vmem:[#allocation5 + $0x480] sm:$0xff]
    %v213 = vld [vmem:[#allocation5 + $0x488] sm:$0xff]
    %v214 = vld [vmem:[#allocation5 + $0x490] sm:$0xff]
    %v215 = vld [vmem:[#allocation5 + $0x498] sm:$0xff]
    %v216 = vld [vmem:[#allocation5 + $0x4a0] sm:$0xff]
    %v217 = vld [vmem:[#allocation5 + $0x4a8] sm:$0xff]
    %v218 = vld [vmem:[#allocation5 + $0x4b0] sm:$0xff]
    %v219 = vld [vmem:[#allocation5 + $0x4b8] sm:$0xff]
    %v220 = vld [vmem:[#allocation5 + $0x4c0] sm:$0xff]
    %v221 = vld [vmem:[#allocation5 + $0x4c8] sm:$0xff]
    %v222 = vld [vmem:[#allocation5 + $0x4d0] sm:$0xff]
    %v223 = vld [vmem:[#allocation5 + $0x4d8] sm:$0xff]
    %v224 = vld [vmem:[#allocation5 + $0x4e0] sm:$0xff]
    %v225 = vld [vmem:[#allocation5 + $0x4e8] sm:$0xff]
    %v226 = vld [vmem:[#allocation5 + $0x4f0] sm:$0xff]
    %v227 = vld [vmem:[#allocation5 + $0x4f8] sm:$0xff]
    %v228 = vld [vmem:[#allocation5 + $0x500] sm:$0xff]
    %v229 = vld [vmem:[#allocation5 + $0x508] sm:$0xff]
    %v230 = vld [vmem:[#allocation5 + $0x510] sm:$0xff]
    %v231 = vld [vmem:[#allocation5 + $0x518] sm:$0xff]
    %v232 = vld [vmem:[#allocation5 + $0x520] sm:$0xff]
    %v233 = vld [vmem:[#allocation5 + $0x528] sm:$0xff]
    %v234 = vld [vmem:[#allocation5 + $0x530] sm:$0xff]
    %v235 = vld [vmem:[#allocation5 + $0x538] sm:$0xff]
    %v236 = vld [vmem:[#allocation5 + $0x540] sm:$0xff]
    %v237 = vld [vmem:[#allocation5 + $0x548] sm:$0xff]
    %v238 = vld [vmem:[#allocation5 + $0x550] sm:$0xff]
    %v239 = vld [vmem:[#allocation5 + $0x558] sm:$0xff]
    %v240 = vld [vmem:[#allocation5 + $0x560] sm:$0xff]
    %v241 = vld [vmem:[#allocation5 + $0x568] sm:$0xff]
    %v242 = vld [vmem:[#allocation5 + $0x570] sm:$0xff]
    %v243 = vld [vmem:[#allocation5 + $0x578] sm:$0xff]
    %v244 = vld [vmem:[#allocation5 + $0x580] sm:$0xff]
    %v245 = vld [vmem:[#allocation5 + $0x588] sm:$0xff]
    %v246 = vld [vmem:[#allocation5 + $0x590] sm:$0xff]
    %v247 = vld [vmem:[#allocation5 + $0x598] sm:$0xff]
    %v248 = vld [vmem:[#allocation5 + $0x5a0] sm:$0xff]
    %v249 = vld [vmem:[#allocation5 + $0x5a8] sm:$0xff]
    %v250 = vld [vmem:[#allocation5 + $0x5b0] sm:$0xff]
    %v251 = vld [vmem:[#allocation5 + $0x5b8] sm:$0xff]
    %v252 = vld [vmem:[#allocation5 + $0x5c0] sm:$0xff]
    %v253 = vld [vmem:[#allocation5 + $0x5c8] sm:$0xff]
    %v254 = vld [vmem:[#allocation5 + $0x5d0] sm:$0xff]
    %v255 = vld [vmem:[#allocation5 + $0x5d8] sm:$0xff]
    %v256 = vld [vmem:[#allocation5 + $0x5e0] sm:$0xff]
    %v257 = vld [vmem:[#allocation5 + $0x5e8] sm:$0xff]
    %v258 = vld [vmem:[#allocation5 + $0x5f0] sm:$0xff]
    %v259 = vld [vmem:[#allocation5 + $0x5f8] sm:$0xff]
    %v260 = vld [vmem:[%s2] sm:$0xf]
    %v262 = vlaneseq
    %v263 = vshrl.u32 %v262, 7
    %v264 = vsub.s32 0, %v263
    %v265 = vrot.slane %v260, %v264
    %v266 = vlaneseq
    %v267 = vshrl.u32 %v266, 7
    %v268 = vsub.s32 1, %v267
    %v269 = vrot.slane %v260, %v268
    %v270 = vlaneseq
    %v271 = vshrl.u32 %v270, 7
    %v272 = vsub.s32 2, %v271
    %v273 = vrot.slane %v260, %v272
    %v274 = vlaneseq
    %v275 = vshrl.u32 %v274, 7
    %v276 = vsub.s32 3, %v275
    %v277 = vrot.slane %v260, %v276
    %v288 = vunpack.c.l.b16 %v62
    %v289 = vunpack.c.h.b16 %v62
    %v290 = vunpack.c.l.b16 %v63
    %v291 = vunpack.c.h.b16 %v63
    %v292 = vunpack.c.l.b16 %v64
    %v293 = vunpack.c.h.b16 %v64
    %v294 = vunpack.c.l.b16 %v65
    %v295 = vunpack.c.h.b16 %v65
    %v296 = vunpack.c.l.b16 %v66
    %v297 = vunpack.c.h.b16 %v66
    %v298 = vunpack.c.l.b16 %v67
    %v299 = vunpack.c.h.b16 %v67
    %v300 = vpack.c.b16 %v294, %v288
    %v301 = vpack.c.b16 %v295, %v289
    %v302 = vpack.c.b16 %v296, %v290
    %v303 = vpack.c.b16 %v297, %v291
    %v304 = vpack.c.b16 %v298, %v292
    %v305 = vpack.c.b16 %v299, %v293
    %v504 = vunpack.c.l.b16 %v68
    %v505 = vunpack.c.h.b16 %v68
    %v506 = vunpack.c.l.b16 %v69
    %v507 = vunpack.c.h.b16 %v69
    %v508 = vunpack.c.l.b16 %v70
    %v509 = vunpack.c.h.b16 %v70
    %v510 = vunpack.c.l.b16 %v71
    %v511 = vunpack.c.h.b16 %v71
    %v512 = vunpack.c.l.b16 %v72
    %v513 = vunpack.c.h.b16 %v72
    %v514 = vunpack.c.l.b16 %v73
    %v515 = vunpack.c.h.b16 %v73
    %v516 = vunpack.c.l.b16 %v74
    %v517 = vunpack.c.h.b16 %v74
    %v518 = vunpack.c.l.b16 %v75
    %v519 = vunpack.c.h.b16 %v75
    %v520 = vunpack.c.l.b16 %v76
    %v521 = vunpack.c.h.b16 %v76
    %v522 = vunpack.c.l.b16 %v77
    %v523 = vunpack.c.h.b16 %v77
    %v524 = vunpack.c.l.b16 %v78
    %v525 = vunpack.c.h.b16 %v78
    %v526 = vunpack.c.l.b16 %v79
    %v527 = vunpack.c.h.b16 %v79
    %v528 = vunpack.c.l.b16 %v80
    %v529 = vunpack.c.h.b16 %v80
    %v530 = vunpack.c.l.b16 %v81
    %v531 = vunpack.c.h.b16 %v81
    %v532 = vunpack.c.l.b16 %v82
    %v533 = vunpack.c.h.b16 %v82
    %v534 = vunpack.c.l.b16 %v83
    %v535 = vunpack.c.h.b16 %v83
    %v536 = vunpack.c.l.b16 %v84
    %v537 = vunpack.c.h.b16 %v84
    %v538 = vunpack.c.l.b16 %v85
    %v539 = vunpack.c.h.b16 %v85
    %v540 = vunpack.c.l.b16 %v86
    %v541 = vunpack.c.h.b16 %v86
    %v542 = vunpack.c.l.b16 %v87
    %v543 = vunpack.c.h.b16 %v87
    %v544 = vunpack.c.l.b16 %v88
    %v545 = vunpack.c.h.b16 %v88
    %v546 = vunpack.c.l.b16 %v89
    %v547 = vunpack.c.h.b16 %v89
    %v548 = vunpack.c.l.b16 %v90
    %v549 = vunpack.c.h.b16 %v90
    %v550 = vunpack.c.l.b16 %v91
    %v551 = vunpack.c.h.b16 %v91
    %v552 = vunpack.c.l.b16 %v92
    %v553 = vunpack.c.h.b16 %v92
    %v554 = vunpack.c.l.b16 %v93
    %v555 = vunpack.c.h.b16 %v93
    %v556 = vunpack.c.l.b16 %v94
    %v557 = vunpack.c.h.b16 %v94
    %v558 = vunpack.c.l.b16 %v95
    %v559 = vunpack.c.h.b16 %v95
    %v560 = vunpack.c.l.b16 %v96
    %v561 = vunpack.c.h.b16 %v96
    %v562 = vunpack.c.l.b16 %v97
    %v563 = vunpack.c.h.b16 %v97
    %v564 = vunpack.c.l.b16 %v98
    %v565 = vunpack.c.h.b16 %v98
    %v566 = vunpack.c.l.b16 %v99
    %v567 = vunpack.c.h.b16 %v99
    %v568 = vunpack.c.l.b16 %v100
    %v569 = vunpack.c.h.b16 %v100
    %v570 = vunpack.c.l.b16 %v101
    %v571 = vunpack.c.h.b16 %v101
    %v572 = vunpack.c.l.b16 %v102
    %v573 = vunpack.c.h.b16 %v102
    %v574 = vunpack.c.l.b16 %v103
    %v575 = vunpack.c.h.b16 %v103
    %v576 = vunpack.c.l.b16 %v104
    %v577 = vunpack.c.h.b16 %v104
    %v578 = vunpack.c.l.b16 %v105
    %v579 = vunpack.c.h.b16 %v105
    %v580 = vunpack.c.l.b16 %v106
    %v581 = vunpack.c.h.b16 %v106
    %v582 = vunpack.c.l.b16 %v107
    %v583 = vunpack.c.h.b16 %v107
    %v584 = vunpack.c.l.b16 %v108
    %v585 = vunpack.c.h.b16 %v108
    %v586 = vunpack.c.l.b16 %v109
    %v587 = vunpack.c.h.b16 %v109
    %v588 = vunpack.c.l.b16 %v110
    %v589 = vunpack.c.h.b16 %v110
    %v590 = vunpack.c.l.b16 %v111
    %v591 = vunpack.c.h.b16 %v111
    %v592 = vunpack.c.l.b16 %v112
    %v593 = vunpack.c.h.b16 %v112
    %v594 = vunpack.c.l.b16 %v113
    %v595 = vunpack.c.h.b16 %v113
    %v596 = vunpack.c.l.b16 %v114
    %v597 = vunpack.c.h.b16 %v114
    %v598 = vunpack.c.l.b16 %v115
    %v599 = vunpack.c.h.b16 %v115
    %v600 = vunpack.c.l.b16 %v116
    %v601 = vunpack.c.h.b16 %v116
    %v602 = vunpack.c.l.b16 %v117
    %v603 = vunpack.c.h.b16 %v117
    %v604 = vunpack.c.l.b16 %v118
    %v605 = vunpack.c.h.b16 %v118
    %v606 = vunpack.c.l.b16 %v119
    %v607 = vunpack.c.h.b16 %v119
    %v608 = vunpack.c.l.b16 %v120
    %v609 = vunpack.c.h.b16 %v120
    %v610 = vunpack.c.l.b16 %v121
    %v611 = vunpack.c.h.b16 %v121
    %v612 = vunpack.c.l.b16 %v122
    %v613 = vunpack.c.h.b16 %v122
    %v614 = vunpack.c.l.b16 %v123
    %v615 = vunpack.c.h.b16 %v123
    %v616 = vunpack.c.l.b16 %v124
    %v617 = vunpack.c.h.b16 %v124
    %v618 = vunpack.c.l.b16 %v125
    %v619 = vunpack.c.h.b16 %v125
    %v620 = vunpack.c.l.b16 %v126
    %v621 = vunpack.c.h.b16 %v126
    %v622 = vunpack.c.l.b16 %v127
    %v623 = vunpack.c.h.b16 %v127
    %v624 = vunpack.c.l.b16 %v128
    %v625 = vunpack.c.h.b16 %v128
    %v626 = vunpack.c.l.b16 %v129
    %v627 = vunpack.c.h.b16 %v129
    %v628 = vunpack.c.l.b16 %v130
    %v629 = vunpack.c.h.b16 %v130
    %v630 = vunpack.c.l.b16 %v131
    %v631 = vunpack.c.h.b16 %v131
    %v632 = vunpack.c.l.b16 %v132
    %v633 = vunpack.c.h.b16 %v132
    %v634 = vunpack.c.l.b16 %v133
    %v635 = vunpack.c.h.b16 %v133
    %v636 = vunpack.c.l.b16 %v134
    %v637 = vunpack.c.h.b16 %v134
    %v638 = vunpack.c.l.b16 %v135
    %v639 = vunpack.c.h.b16 %v135
    %v640 = vunpack.c.l.b16 %v136
    %v641 = vunpack.c.h.b16 %v136
    %v642 = vunpack.c.l.b16 %v137
    %v643 = vunpack.c.h.b16 %v137
    %v644 = vunpack.c.l.b16 %v138
    %v645 = vunpack.c.h.b16 %v138
    %v646 = vunpack.c.l.b16 %v139
    %v647 = vunpack.c.h.b16 %v139
    %v648 = vunpack.c.l.b16 %v140
    %v649 = vunpack.c.h.b16 %v140
    %v650 = vunpack.c.l.b16 %v141
    %v651 = vunpack.c.h.b16 %v141
    %v652 = vunpack.c.l.b16 %v142
    %v653 = vunpack.c.h.b16 %v142
    %v654 = vunpack.c.l.b16 %v143
    %v655 = vunpack.c.h.b16 %v143
    %v656 = vunpack.c.l.b16 %v144
    %v657 = vunpack.c.h.b16 %v144
    %v658 = vunpack.c.l.b16 %v145
    %v659 = vunpack.c.h.b16 %v145
    %v660 = vunpack.c.l.b16 %v146
    %v661 = vunpack.c.h.b16 %v146
    %v662 = vunpack.c.l.b16 %v147
    %v663 = vunpack.c.h.b16 %v147
    %v664 = vunpack.c.l.b16 %v148
    %v665 = vunpack.c.h.b16 %v148
    %v666 = vunpack.c.l.b16 %v149
    %v667 = vunpack.c.h.b16 %v149
    %v668 = vunpack.c.l.b16 %v150
    %v669 = vunpack.c.h.b16 %v150
    %v670 = vunpack.c.l.b16 %v151
    %v671 = vunpack.c.h.b16 %v151
    %v672 = vunpack.c.l.b16 %v152
    %v673 = vunpack.c.h.b16 %v152
    %v674 = vunpack.c.l.b16 %v153
    %v675 = vunpack.c.h.b16 %v153
    %v676 = vunpack.c.l.b16 %v154
    %v677 = vunpack.c.h.b16 %v154
    %v678 = vunpack.c.l.b16 %v155
    %v679 = vunpack.c.h.b16 %v155
    %v680 = vunpack.c.l.b16 %v156
    %v681 = vunpack.c.h.b16 %v156
    %v682 = vunpack.c.l.b16 %v157
    %v683 = vunpack.c.h.b16 %v157
    %v684 = vunpack.c.l.b16 %v158
    %v685 = vunpack.c.h.b16 %v158
    %v686 = vunpack.c.l.b16 %v159
    %v687 = vunpack.c.h.b16 %v159
    %v688 = vunpack.c.l.b16 %v160
    %v689 = vunpack.c.h.b16 %v160
    %v690 = vunpack.c.l.b16 %v161
    %v691 = vunpack.c.h.b16 %v161
    %v692 = vunpack.c.l.b16 %v162
    %v693 = vunpack.c.h.b16 %v162
    %v694 = vunpack.c.l.b16 %v163
    %v695 = vunpack.c.h.b16 %v163
    %v696 = vunpack.c.l.b16 %v164
    %v697 = vunpack.c.h.b16 %v164
    %v698 = vunpack.c.l.b16 %v165
    %v699 = vunpack.c.h.b16 %v165
    %v700 = vunpack.c.l.b16 %v166
    %v701 = vunpack.c.h.b16 %v166
    %v702 = vunpack.c.l.b16 %v167
    %v703 = vunpack.c.h.b16 %v167
    %v704 = vunpack.c.l.b16 %v168
    %v705 = vunpack.c.h.b16 %v168
    %v706 = vunpack.c.l.b16 %v169
    %v707 = vunpack.c.h.b16 %v169
    %v708 = vunpack.c.l.b16 %v170
    %v709 = vunpack.c.h.b16 %v170
    %v710 = vunpack.c.l.b16 %v171
    %v711 = vunpack.c.h.b16 %v171
    %v712 = vunpack.c.l.b16 %v172
    %v713 = vunpack.c.h.b16 %v172
    %v714 = vunpack.c.l.b16 %v173
    %v715 = vunpack.c.h.b16 %v173
    %v716 = vunpack.c.l.b16 %v174
    %v717 = vunpack.c.h.b16 %v174
    %v718 = vunpack.c.l.b16 %v175
    %v719 = vunpack.c.h.b16 %v175
    %v720 = vunpack.c.l.b16 %v176
    %v721 = vunpack.c.h.b16 %v176
    %v722 = vunpack.c.l.b16 %v177
    %v723 = vunpack.c.h.b16 %v177
    %v724 = vunpack.c.l.b16 %v178
    %v725 = vunpack.c.h.b16 %v178
    %v726 = vunpack.c.l.b16 %v179
    %v727 = vunpack.c.h.b16 %v179
    %v728 = vunpack.c.l.b16 %v180
    %v729 = vunpack.c.h.b16 %v180
    %v730 = vunpack.c.l.b16 %v181
    %v731 = vunpack.c.h.b16 %v181
    %v732 = vunpack.c.l.b16 %v182
    %v733 = vunpack.c.h.b16 %v182
    %v734 = vunpack.c.l.b16 %v183
    %v735 = vunpack.c.h.b16 %v183
    %v736 = vunpack.c.l.b16 %v184
    %v737 = vunpack.c.h.b16 %v184
    %v738 = vunpack.c.l.b16 %v185
    %v739 = vunpack.c.h.b16 %v185
    %v740 = vunpack.c.l.b16 %v186
    %v741 = vunpack.c.h.b16 %v186
    %v742 = vunpack.c.l.b16 %v187
    %v743 = vunpack.c.h.b16 %v187
    %v744 = vunpack.c.l.b16 %v188
    %v745 = vunpack.c.h.b16 %v188
    %v746 = vunpack.c.l.b16 %v189
    %v747 = vunpack.c.h.b16 %v189
    %v748 = vunpack.c.l.b16 %v190
    %v749 = vunpack.c.h.b16 %v190
    %v750 = vunpack.c.l.b16 %v191
    %v751 = vunpack.c.h.b16 %v191
    %v752 = vunpack.c.l.b16 %v192
    %v753 = vunpack.c.h.b16 %v192
    %v754 = vunpack.c.l.b16 %v193
    %v755 = vunpack.c.h.b16 %v193
    %v756 = vunpack.c.l.b16 %v194
    %v757 = vunpack.c.h.b16 %v194
    %v758 = vunpack.c.l.b16 %v195
    %v759 = vunpack.c.h.b16 %v195
    %v760 = vunpack.c.l.b16 %v196
    %v761 = vunpack.c.h.b16 %v196
    %v762 = vunpack.c.l.b16 %v197
    %v763 = vunpack.c.h.b16 %v197
    %v764 = vunpack.c.l.b16 %v198
    %v765 = vunpack.c.h.b16 %v198
    %v766 = vunpack.c.l.b16 %v199
    %v767 = vunpack.c.h.b16 %v199
    %v768 = vunpack.c.l.b16 %v200
    %v769 = vunpack.c.h.b16 %v200
    %v770 = vunpack.c.l.b16 %v201
    %v771 = vunpack.c.h.b16 %v201
    %v772 = vunpack.c.l.b16 %v202
    %v773 = vunpack.c.h.b16 %v202
    %v774 = vunpack.c.l.b16 %v203
    %v775 = vunpack.c.h.b16 %v203
    %v776 = vunpack.c.l.b16 %v204
    %v777 = vunpack.c.h.b16 %v204
    %v778 = vunpack.c.l.b16 %v205
    %v779 = vunpack.c.h.b16 %v205
    %v780 = vunpack.c.l.b16 %v206
    %v781 = vunpack.c.h.b16 %v206
    %v782 = vunpack.c.l.b16 %v207
    %v783 = vunpack.c.h.b16 %v207
    %v784 = vunpack.c.l.b16 %v208
    %v785 = vunpack.c.h.b16 %v208
    %v786 = vunpack.c.l.b16 %v209
    %v787 = vunpack.c.h.b16 %v209
    %v788 = vunpack.c.l.b16 %v210
    %v789 = vunpack.c.h.b16 %v210
    %v790 = vunpack.c.l.b16 %v211
    %v791 = vunpack.c.h.b16 %v211
    %v792 = vunpack.c.l.b16 %v212
    %v793 = vunpack.c.h.b16 %v212
    %v794 = vunpack.c.l.b16 %v213
    %v795 = vunpack.c.h.b16 %v213
    %v796 = vunpack.c.l.b16 %v214
    %v797 = vunpack.c.h.b16 %v214
    %v798 = vunpack.c.l.b16 %v215
    %v799 = vunpack.c.h.b16 %v215
    %v800 = vunpack.c.l.b16 %v216
    %v801 = vunpack.c.h.b16 %v216
    %v802 = vunpack.c.l.b16 %v217
    %v803 = vunpack.c.h.b16 %v217
    %v804 = vunpack.c.l.b16 %v218
    %v805 = vunpack.c.h.b16 %v218
    %v806 = vunpack.c.l.b16 %v219
    %v807 = vunpack.c.h.b16 %v219
    %v808 = vunpack.c.l.b16 %v220
    %v809 = vunpack.c.h.b16 %v220
    %v810 = vunpack.c.l.b16 %v221
    %v811 = vunpack.c.h.b16 %v221
    %v812 = vunpack.c.l.b16 %v222
    %v813 = vunpack.c.h.b16 %v222
    %v814 = vunpack.c.l.b16 %v223
    %v815 = vunpack.c.h.b16 %v223
    %v816 = vunpack.c.l.b16 %v224
    %v817 = vunpack.c.h.b16 %v224
    %v818 = vunpack.c.l.b16 %v225
    %v819 = vunpack.c.h.b16 %v225
    %v820 = vunpack.c.l.b16 %v226
    %v821 = vunpack.c.h.b16 %v226
    %v822 = vunpack.c.l.b16 %v227
    %v823 = vunpack.c.h.b16 %v227
    %v824 = vunpack.c.l.b16 %v228
    %v825 = vunpack.c.h.b16 %v228
    %v826 = vunpack.c.l.b16 %v229
    %v827 = vunpack.c.h.b16 %v229
    %v828 = vunpack.c.l.b16 %v230
    %v829 = vunpack.c.h.b16 %v230
    %v830 = vunpack.c.l.b16 %v231
    %v831 = vunpack.c.h.b16 %v231
    %v832 = vunpack.c.l.b16 %v232
    %v833 = vunpack.c.h.b16 %v232
    %v834 = vunpack.c.l.b16 %v233
    %v835 = vunpack.c.h.b16 %v233
    %v836 = vunpack.c.l.b16 %v234
    %v837 = vunpack.c.h.b16 %v234
    %v838 = vunpack.c.l.b16 %v235
    %v839 = vunpack.c.h.b16 %v235
    %v840 = vunpack.c.l.b16 %v236
    %v841 = vunpack.c.h.b16 %v236
    %v842 = vunpack.c.l.b16 %v237
    %v843 = vunpack.c.h.b16 %v237
    %v844 = vunpack.c.l.b16 %v238
    %v845 = vunpack.c.h.b16 %v238
    %v846 = vunpack.c.l.b16 %v239
    %v847 = vunpack.c.h.b16 %v239
    %v848 = vunpack.c.l.b16 %v240
    %v849 = vunpack.c.h.b16 %v240
    %v850 = vunpack.c.l.b16 %v241
    %v851 = vunpack.c.h.b16 %v241
    %v852 = vunpack.c.l.b16 %v242
    %v853 = vunpack.c.h.b16 %v242
    %v854 = vunpack.c.l.b16 %v243
    %v855 = vunpack.c.h.b16 %v243
    %v856 = vunpack.c.l.b16 %v244
    %v857 = vunpack.c.h.b16 %v244
    %v858 = vunpack.c.l.b16 %v245
    %v859 = vunpack.c.h.b16 %v245
    %v860 = vunpack.c.l.b16 %v246
    %v861 = vunpack.c.h.b16 %v246
    %v862 = vunpack.c.l.b16 %v247
    %v863 = vunpack.c.h.b16 %v247
    %v864 = vunpack.c.l.b16 %v248
    %v865 = vunpack.c.h.b16 %v248
    %v866 = vunpack.c.l.b16 %v249
    %v867 = vunpack.c.h.b16 %v249
    %v868 = vunpack.c.l.b16 %v250
    %v869 = vunpack.c.h.b16 %v250
    %v870 = vunpack.c.l.b16 %v251
    %v871 = vunpack.c.h.b16 %v251
    %v872 = vunpack.c.l.b16 %v252
    %v873 = vunpack.c.h.b16 %v252
    %v874 = vunpack.c.l.b16 %v253
    %v875 = vunpack.c.h.b16 %v253
    %v876 = vunpack.c.l.b16 %v254
    %v877 = vunpack.c.h.b16 %v254
    %v878 = vunpack.c.l.b16 %v255
    %v879 = vunpack.c.h.b16 %v255
    %v880 = vunpack.c.l.b16 %v256
    %v881 = vunpack.c.h.b16 %v256
    %v882 = vunpack.c.l.b16 %v257
    %v883 = vunpack.c.h.b16 %v257
    %v884 = vunpack.c.l.b16 %v258
    %v885 = vunpack.c.h.b16 %v258
    %v886 = vunpack.c.l.b16 %v259
    %v887 = vunpack.c.h.b16 %v259
    %v888 = vpack.c.b16 %v508, %v504
    %v889 = vpack.c.b16 %v509, %v505
    %v890 = vpack.c.b16 %v510, %v506
    %v891 = vpack.c.b16 %v511, %v507
    %v892 = vpack.c.b16 %v516, %v512
    %v893 = vpack.c.b16 %v517, %v513
    %v894 = vpack.c.b16 %v518, %v514
    %v895 = vpack.c.b16 %v519, %v515
    %v896 = vpack.c.b16 %v524, %v520
    %v897 = vpack.c.b16 %v525, %v521
    %v898 = vpack.c.b16 %v526, %v522
    %v899 = vpack.c.b16 %v527, %v523
    %v900 = vpack.c.b16 %v532, %v528
    %v901 = vpack.c.b16 %v533, %v529
    %v902 = vpack.c.b16 %v534, %v530
    %v903 = vpack.c.b16 %v535, %v531
    %v904 = vpack.c.b16 %v540, %v536
    %v905 = vpack.c.b16 %v541, %v537
    %v906 = vpack.c.b16 %v542, %v538
    %v907 = vpack.c.b16 %v543, %v539
    %v908 = vpack.c.b16 %v548, %v544
    %v909 = vpack.c.b16 %v549, %v545
    %v910 = vpack.c.b16 %v550, %v546
    %v911 = vpack.c.b16 %v551, %v547
    %v912 = vpack.c.b16 %v556, %v552
    %v913 = vpack.c.b16 %v557, %v553
    %v914 = vpack.c.b16 %v558, %v554
    %v915 = vpack.c.b16 %v559, %v555
    %v916 = vpack.c.b16 %v564, %v560
    %v917 = vpack.c.b16 %v565, %v561
    %v918 = vpack.c.b16 %v566, %v562
    %v919 = vpack.c.b16 %v567, %v563
    %v920 = vpack.c.b16 %v572, %v568
    %v921 = vpack.c.b16 %v573, %v569
    %v922 = vpack.c.b16 %v574, %v570
    %v923 = vpack.c.b16 %v575, %v571
    %v924 = vpack.c.b16 %v580, %v576
    %v925 = vpack.c.b16 %v581, %v577
    %v926 = vpack.c.b16 %v582, %v578
    %v927 = vpack.c.b16 %v583, %v579
    %v928 = vpack.c.b16 %v588, %v584
    %v929 = vpack.c.b16 %v589, %v585
    %v930 = vpack.c.b16 %v590, %v586
    %v931 = vpack.c.b16 %v591, %v587
    %v932 = vpack.c.b16 %v596, %v592
    %v933 = vpack.c.b16 %v597, %v593
    %v934 = vpack.c.b16 %v598, %v594
    %v935 = vpack.c.b16 %v599, %v595
    %v936 = vpack.c.b16 %v604, %v600
    %v937 = vpack.c.b16 %v605, %v601
    %v938 = vpack.c.b16 %v606, %v602
    %v939 = vpack.c.b16 %v607, %v603
    %v940 = vpack.c.b16 %v612, %v608
    %v941 = vpack.c.b16 %v613, %v609
    %v942 = vpack.c.b16 %v614, %v610
    %v943 = vpack.c.b16 %v615, %v611
    %v944 = vpack.c.b16 %v620, %v616
    %v945 = vpack.c.b16 %v621, %v617
    %v946 = vpack.c.b16 %v622, %v618
    %v947 = vpack.c.b16 %v623, %v619
    %v948 = vpack.c.b16 %v628, %v624
    %v949 = vpack.c.b16 %v629, %v625
    %v950 = vpack.c.b16 %v630, %v626
    %v951 = vpack.c.b16 %v631, %v627
    %v952 = vpack.c.b16 %v636, %v632
    %v953 = vpack.c.b16 %v637, %v633
    %v954 = vpack.c.b16 %v638, %v634
    %v955 = vpack.c.b16 %v639, %v635
    %v956 = vpack.c.b16 %v644, %v640
    %v957 = vpack.c.b16 %v645, %v641
    %v958 = vpack.c.b16 %v646, %v642
    %v959 = vpack.c.b16 %v647, %v643
    %v960 = vpack.c.b16 %v652, %v648
    %v961 = vpack.c.b16 %v653, %v649
    %v962 = vpack.c.b16 %v654, %v650
    %v963 = vpack.c.b16 %v655, %v651
    %v964 = vpack.c.b16 %v660, %v656
    %v965 = vpack.c.b16 %v661, %v657
    %v966 = vpack.c.b16 %v662, %v658
    %v967 = vpack.c.b16 %v663, %v659
    %v968 = vpack.c.b16 %v668, %v664
    %v969 = vpack.c.b16 %v669, %v665
    %v970 = vpack.c.b16 %v670, %v666
    %v971 = vpack.c.b16 %v671, %v667
    %v972 = vpack.c.b16 %v676, %v672
    %v973 = vpack.c.b16 %v677, %v673
    %v974 = vpack.c.b16 %v678, %v674
    %v975 = vpack.c.b16 %v679, %v675
    %v976 = vpack.c.b16 %v684, %v680
    %v977 = vpack.c.b16 %v685, %v681
    %v978 = vpack.c.b16 %v686, %v682
    %v979 = vpack.c.b16 %v687, %v683
    %v980 = vpack.c.b16 %v692, %v688
    %v981 = vpack.c.b16 %v693, %v689
    %v982 = vpack.c.b16 %v694, %v690
    %v983 = vpack.c.b16 %v695, %v691
    %v984 = vpack.c.b16 %v700, %v696
    %v985 = vpack.c.b16 %v701, %v697
    %v986 = vpack.c.b16 %v702, %v698
    %v987 = vpack.c.b16 %v703, %v699
    %v988 = vpack.c.b16 %v708, %v704
    %v989 = vpack.c.b16 %v709, %v705
    %v990 = vpack.c.b16 %v710, %v706
    %v991 = vpack.c.b16 %v711, %v707
    %v992 = vpack.c.b16 %v716, %v712
    %v993 = vpack.c.b16 %v717, %v713
    %v994 = vpack.c.b16 %v718, %v714
    %v995 = vpack.c.b16 %v719, %v715
    %v996 = vpack.c.b16 %v724, %v720
    %v997 = vpack.c.b16 %v725, %v721
    %v998 = vpack.c.b16 %v726, %v722
    %v999 = vpack.c.b16 %v727, %v723
    %v1000 = vpack.c.b16 %v732, %v728
    %v1001 = vpack.c.b16 %v733, %v729
    %v1002 = vpack.c.b16 %v734, %v730
    %v1003 = vpack.c.b16 %v735, %v731
    %v1004 = vpack.c.b16 %v740, %v736
    %v1005 = vpack.c.b16 %v741, %v737
    %v1006 = vpack.c.b16 %v742, %v738
    %v1007 = vpack.c.b16 %v743, %v739
    %v1008 = vpack.c.b16 %v748, %v744
    %v1009 = vpack.c.b16 %v749, %v745
    %v1010 = vpack.c.b16 %v750, %v746
    %v1011 = vpack.c.b16 %v751, %v747
    %v1012 = vpack.c.b16 %v756, %v752
    %v1013 = vpack.c.b16 %v757, %v753
    %v1014 = vpack.c.b16 %v758, %v754
    %v1015 = vpack.c.b16 %v759, %v755
    %v1016 = vpack.c.b16 %v764, %v760
    %v1017 = vpack.c.b16 %v765, %v761
    %v1018 = vpack.c.b16 %v766, %v762
    %v1019 = vpack.c.b16 %v767, %v763
    %v1020 = vpack.c.b16 %v772, %v768
    %v1021 = vpack.c.b16 %v773, %v769
    %v1022 = vpack.c.b16 %v774, %v770
    %v1023 = vpack.c.b16 %v775, %v771
    %v1024 = vpack.c.b16 %v780, %v776
    %v1025 = vpack.c.b16 %v781, %v777
    %v1026 = vpack.c.b16 %v782, %v778
    %v1027 = vpack.c.b16 %v783, %v779
    %v1028 = vpack.c.b16 %v788, %v784
    %v1029 = vpack.c.b16 %v789, %v785
    %v1030 = vpack.c.b16 %v790, %v786
    %v1031 = vpack.c.b16 %v791, %v787
    %v1032 = vpack.c.b16 %v796, %v792
    %v1033 = vpack.c.b16 %v797, %v793
    %v1034 = vpack.c.b16 %v798, %v794
    %v1035 = vpack.c.b16 %v799, %v795
    %v1036 = vpack.c.b16 %v804, %v800
    %v1037 = vpack.c.b16 %v805, %v801
    %v1038 = vpack.c.b16 %v806, %v802
    %v1039 = vpack.c.b16 %v807, %v803
    %v1040 = vpack.c.b16 %v812, %v808
    %v1041 = vpack.c.b16 %v813, %v809
    %v1042 = vpack.c.b16 %v814, %v810
    %v1043 = vpack.c.b16 %v815, %v811
    %v1044 = vpack.c.b16 %v820, %v816
    %v1045 = vpack.c.b16 %v821, %v817
    %v1046 = vpack.c.b16 %v822, %v818
    %v1047 = vpack.c.b16 %v823, %v819
    %v1048 = vpack.c.b16 %v828, %v824
    %v1049 = vpack.c.b16 %v829, %v825
    %v1050 = vpack.c.b16 %v830, %v826
    %v1051 = vpack.c.b16 %v831, %v827
    %v1052 = vpack.c.b16 %v836, %v832
    %v1053 = vpack.c.b16 %v837, %v833
    %v1054 = vpack.c.b16 %v838, %v834
    %v1055 = vpack.c.b16 %v839, %v835
    %v1056 = vpack.c.b16 %v844, %v840
    %v1057 = vpack.c.b16 %v845, %v841
    %v1058 = vpack.c.b16 %v846, %v842
    %v1059 = vpack.c.b16 %v847, %v843
    %v1060 = vpack.c.b16 %v852, %v848
    %v1061 = vpack.c.b16 %v853, %v849
    %v1062 = vpack.c.b16 %v854, %v850
    %v1063 = vpack.c.b16 %v855, %v851
    %v1064 = vpack.c.b16 %v860, %v856
    %v1065 = vpack.c.b16 %v861, %v857
    %v1066 = vpack.c.b16 %v862, %v858
    %v1067 = vpack.c.b16 %v863, %v859
    %v1068 = vpack.c.b16 %v868, %v864
    %v1069 = vpack.c.b16 %v869, %v865
    %v1070 = vpack.c.b16 %v870, %v866
    %v1071 = vpack.c.b16 %v871, %v867
    %v1072 = vpack.c.b16 %v876, %v872
    %v1073 = vpack.c.b16 %v877, %v873
    %v1074 = vpack.c.b16 %v878, %v874
    %v1075 = vpack.c.b16 %v879, %v875
    %v1076 = vpack.c.b16 %v884, %v880
    %v1077 = vpack.c.b16 %v885, %v881
    %v1078 = vpack.c.b16 %v886, %v882
    %v1079 = vpack.c.b16 %v887, %v883
    %1272 = vmatprep.subr.bf16.mxu0 %v889
    %1273 = vmatpush1.bf16.msra.mxu0 %v888
    %1274 = vmatprep.subr.bf16.mxu0 %v893
    %1275 = vmatpush1.bf16.msra.mxu0 %v892
    %1276 = vmatprep.subr.bf16.mxu0 %v897
    %1277 = vmatpush1.bf16.msra.mxu0 %v896
    %1278 = vmatprep.subr.bf16.mxu0 %v901
    %1279 = vmatpush1.bf16.msra.mxu0 %v900
    %1280 = vmatprep.subr.bf16.mxu0 %v905
    %1281 = vmatpush1.bf16.msra.mxu0 %v904
    %1282 = vmatprep.subr.bf16.mxu0 %v909
    %1283 = vmatpush1.bf16.msra.mxu0 %v908
    %1284 = vmatprep.subr.bf16.mxu0 %v913
    %1285 = vmatpush1.bf16.msra.mxu0 %v912
    %1286 = vmatprep.subr.bf16.mxu0 %v917
    %1287 = vmatpush1.bf16.msra.mxu0 %v916
    %1288 = vmatprep.subr.bf16.mxu0 %v921
    %1289 = vmatpush1.bf16.msra.mxu0 %v920
    %1290 = vmatprep.subr.bf16.mxu0 %v925
    %1291 = vmatpush1.bf16.msra.mxu0 %v924
    %1292 = vmatprep.subr.bf16.mxu0 %v929
    %1293 = vmatpush1.bf16.msra.mxu0 %v928
    %1294 = vmatprep.subr.bf16.mxu0 %v933
    %1295 = vmatpush1.bf16.msra.mxu0 %v932
    %1296 = vmatprep.subr.bf16.mxu0 %v937
    %1297 = vmatpush1.bf16.msra.mxu0 %v936
    %1298 = vmatprep.subr.bf16.mxu0 %v941
    %1299 = vmatpush1.bf16.msra.mxu0 %v940
    %1300 = vmatprep.subr.bf16.mxu0 %v945
    %1301 = vmatpush1.bf16.msra.mxu0 %v944
    %1302 = vmatprep.subr.bf16.mxu0 %v949
    %1303 = vmatpush1.bf16.msra.mxu0 %v948
    %1304 = vmatprep.mubr.bf16.mxu0 %v301
    %1305 = vmatmul.mubr.bf16.gmra.mrb[0].mxu0 %v300
    %v1306 = vpop.f32.mrb[0].mxu0
    %v1307 = vadd.f32 %v265, %v1306
    %v1308 = vpop.f32.mrb[0].mxu0
    %v1309 = vadd.f32 %v269, %v1308
    %v1310 = vpop.f32.mrb[0].mxu0
    %v1311 = vadd.f32 %v265, %v1310
    %v1312 = vpop.f32.mrb[0].mxu0
    %v1313 = vadd.f32 %v269, %v1312
    %1314 = vdwg.mxu0
    %1315 = vmatprep.subr.bf16.mxu0 %v953
    %1316 = vmatpush1.bf16.msra.mxu0 %v952
    %1317 = vmatprep.subr.bf16.mxu0 %v957
    %1318 = vmatpush1.bf16.msra.mxu0 %v956
    %1319 = vmatprep.subr.bf16.mxu0 %v961
    %1320 = vmatpush1.bf16.msra.mxu0 %v960
    %1321 = vmatprep.subr.bf16.mxu0 %v965
    %1322 = vmatpush1.bf16.msra.mxu0 %v964
    %1323 = vmatprep.subr.bf16.mxu0 %v969
    %1324 = vmatpush1.bf16.msra.mxu0 %v968
    %1325 = vmatprep.subr.bf16.mxu0 %v973
    %1326 = vmatpush1.bf16.msra.mxu0 %v972
    %1327 = vmatprep.subr.bf16.mxu0 %v977
    %1328 = vmatpush1.bf16.msra.mxu0 %v976
    %1329 = vmatprep.subr.bf16.mxu0 %v981
    %1330 = vmatpush1.bf16.msra.mxu0 %v980
    %1331 = vmatprep.subr.bf16.mxu0 %v985
    %1332 = vmatpush1.bf16.msra.mxu0 %v984
    %1333 = vmatprep.subr.bf16.mxu0 %v989
    %1334 = vmatpush1.bf16.msra.mxu0 %v988
    %1335 = vmatprep.subr.bf16.mxu0 %v993
    %1336 = vmatpush1.bf16.msra.mxu0 %v992
    %1337 = vmatprep.subr.bf16.mxu0 %v997
    %1338 = vmatpush1.bf16.msra.mxu0 %v996
    %1339 = vmatprep.subr.bf16.mxu0 %v1001
    %1340 = vmatpush1.bf16.msra.mxu0 %v1000
    %1341 = vmatprep.subr.bf16.mxu0 %v1005
    %1342 = vmatpush1.bf16.msra.mxu0 %v1004
    %1343 = vmatprep.subr.bf16.mxu0 %v1009
    %1344 = vmatpush1.bf16.msra.mxu0 %v1008
    %1345 = vmatprep.subr.bf16.mxu0 %v1013
    %1346 = vmatpush1.bf16.msra.mxu0 %v1012
    %1347 = vmatprep.mubr.bf16.mxu0 %v303
    %1348 = vmatmul.mubr.bf16.gmra.mrb[0].mxu0 %v302
    %v1349 = vpop.f32.mrb[0].mxu0
    %v1350 = vadd.f32 %v1307, %v1349
    %v1351 = vpop.f32.mrb[0].mxu0
    %v1352 = vadd.f32 %v1309, %v1351
    %v1353 = vpop.f32.mrb[0].mxu0
    %v1354 = vadd.f32 %v1311, %v1353
    %v1355 = vpop.f32.mrb[0].mxu0
    %v1356 = vadd.f32 %v1313, %v1355
    %1357 = vdwg.mxu0
    %1358 = vmatprep.subr.bf16.mxu0 %v1017
    %1359 = vmatpush1.bf16.msra.mxu0 %v1016
    %1360 = vmatprep.subr.bf16.mxu0 %v1021
    %1361 = vmatpush1.bf16.msra.mxu0 %v1020
    %1362 = vmatprep.subr.bf16.mxu0 %v1025
    %1363 = vmatpush1.bf16.msra.mxu0 %v1024
    %1364 = vmatprep.subr.bf16.mxu0 %v1029
    %1365 = vmatpush1.bf16.msra.mxu0 %v1028
    %1366 = vmatprep.subr.bf16.mxu0 %v1033
    %1367 = vmatpush1.bf16.msra.mxu0 %v1032
    %1368 = vmatprep.subr.bf16.mxu0 %v1037
    %1369 = vmatpush1.bf16.msra.mxu0 %v1036
    %1370 = vmatprep.subr.bf16.mxu0 %v1041
    %1371 = vmatpush1.bf16.msra.mxu0 %v1040
    %1372 = vmatprep.subr.bf16.mxu0 %v1045
    %1373 = vmatpush1.bf16.msra.mxu0 %v1044
    %1374 = vmatprep.subr.bf16.mxu0 %v1049
    %1375 = vmatpush1.bf16.msra.mxu0 %v1048
    %1376 = vmatprep.subr.bf16.mxu0 %v1053
    %1377 = vmatpush1.bf16.msra.mxu0 %v1052
    %1378 = vmatprep.subr.bf16.mxu0 %v1057
    %1379 = vmatpush1.bf16.msra.mxu0 %v1056
    %1380 = vmatprep.subr.bf16.mxu0 %v1061
    %1381 = vmatpush1.bf16.msra.mxu0 %v1060
    %1382 = vmatprep.subr.bf16.mxu0 %v1065
    %1383 = vmatpush1.bf16.msra.mxu0 %v1064
    %1384 = vmatprep.subr.bf16.mxu0 %v1069
    %1385 = vmatpush1.bf16.msra.mxu0 %v1068
    %1386 = vmatprep.subr.bf16.mxu0 %v1073
    %1387 = vmatpush1.bf16.msra.mxu0 %v1072
    %1388 = vmatprep.subr.bf16.mxu0 %v1077
    %1389 = vmatpush1.bf16.msra.mxu0 %v1076
    %1390 = vmatprep.mubr.bf16.mxu0 %v305
    %1391 = vmatmul.mubr.bf16.gmra.mrb[0].mxu0 %v304
    %v1392 = vpop.f32.mrb[0].mxu0
    %v1393 = vadd.f32 %v1350, %v1392
    %v1394 = vpop.f32.mrb[0].mxu0
    %v1395 = vadd.f32 %v1352, %v1394
    %v1396 = vpop.f32.mrb[0].mxu0
    %v1397 = vadd.f32 %v1354, %v1396
    %v1398 = vpop.f32.mrb[0].mxu0
    %v1399 = vadd.f32 %v1356, %v1398
    %1400 = vdwg.mxu0
    %1401 = vmatprep.subr.bf16.mxu0 %v891
    %1402 = vmatpush1.bf16.msra.mxu0 %v890
    %1403 = vmatprep.subr.bf16.mxu0 %v895
    %1404 = vmatpush1.bf16.msra.mxu0 %v894
    %1405 = vmatprep.subr.bf16.mxu0 %v899
    %1406 = vmatpush1.bf16.msra.mxu0 %v898
    %1407 = vmatprep.subr.bf16.mxu0 %v903
    %1408 = vmatpush1.bf16.msra.mxu0 %v902
    %1409 = vmatprep.subr.bf16.mxu0 %v907
    %1410 = vmatpush1.bf16.msra.mxu0 %v906
    %1411 = vmatprep.subr.bf16.mxu0 %v911
    %1412 = vmatpush1.bf16.msra.mxu0 %v910
    %1413 = vmatprep.subr.bf16.mxu0 %v915
    %1414 = vmatpush1.bf16.msra.mxu0 %v914
    %1415 = vmatprep.subr.bf16.mxu0 %v919
    %1416 = vmatpush1.bf16.msra.mxu0 %v918
    %1417 = vmatprep.subr.bf16.mxu0 %v923
    %1418 = vmatpush1.bf16.msra.mxu0 %v922
    %1419 = vmatprep.subr.bf16.mxu0 %v927
    %1420 = vmatpush1.bf16.msra.mxu0 %v926
    %1421 = vmatprep.subr.bf16.mxu0 %v931
    %1422 = vmatpush1.bf16.msra.mxu0 %v930
    %1423 = vmatprep.subr.bf16.mxu0 %v935
    %1424 = vmatpush1.bf16.msra.mxu0 %v934
    %1425 = vmatprep.subr.bf16.mxu0 %v939
    %1426 = vmatpush1.bf16.msra.mxu0 %v938
    %1427 = vmatprep.subr.bf16.mxu0 %v943
    %1428 = vmatpush1.bf16.msra.mxu0 %v942
    %1429 = vmatprep.subr.bf16.mxu0 %v947
    %1430 = vmatpush1.bf16.msra.mxu0 %v946
    %1431 = vmatprep.subr.bf16.mxu0 %v951
    %1432 = vmatpush1.bf16.msra.mxu0 %v950
    %1433 = vmatprep.mubr.bf16.mxu0 %v301
    %1434 = vmatmul.mubr.bf16.gmra.mrb[0].mxu0 %v300
    %v1435 = vpop.f32.mrb[0].mxu0
    %v1436 = vadd.f32 %v273, %v1435
    %v1437 = vpop.f32.mrb[0].mxu0
    %v1438 = vadd.f32 %v277, %v1437
    %v1439 = vpop.f32.mrb[0].mxu0
    %v1440 = vadd.f32 %v273, %v1439
    %v1441 = vpop.f32.mrb[0].mxu0
    %v1442 = vadd.f32 %v277, %v1441
    %1443 = vdwg.mxu0
    %1444 = vmatprep.subr.bf16.mxu0 %v955
    %1445 = vmatpush1.bf16.msra.mxu0 %v954
    %1446 = vmatprep.subr.bf16.mxu0 %v959
    %1447 = vmatpush1.bf16.msra.mxu0 %v958
    %1448 = vmatprep.subr.bf16.mxu0 %v963
    %1449 = vmatpush1.bf16.msra.mxu0 %v962
    %1450 = vmatprep.subr.bf16.mxu0 %v967
    %1451 = vmatpush1.bf16.msra.mxu0 %v966
    %1452 = vmatprep.subr.bf16.mxu0 %v971
    %1453 = vmatpush1.bf16.msra.mxu0 %v970
    %1454 = vmatprep.subr.bf16.mxu0 %v975
    %1455 = vmatpush1.bf16.msra.mxu0 %v974
    %1456 = vmatprep.subr.bf16.mxu0 %v979
    %1457 = vmatpush1.bf16.msra.mxu0 %v978
    %1458 = vmatprep.subr.bf16.mxu0 %v983
    %1459 = vmatpush1.bf16.msra.mxu0 %v982
    %1460 = vmatprep.subr.bf16.mxu0 %v987
    %1461 = vmatpush1.bf16.msra.mxu0 %v986
    %1462 = vmatprep.subr.bf16.mxu0 %v991
    %1463 = vmatpush1.bf16.msra.mxu0 %v990
    %1464 = vmatprep.subr.bf16.mxu0 %v995
    %1465 = vmatpush1.bf16.msra.mxu0 %v994
    %1466 = vmatprep.subr.bf16.mxu0 %v999
    %1467 = vmatpush1.bf16.msra.mxu0 %v998
    %1468 = vmatprep.subr.bf16.mxu0 %v1003
    %1469 = vmatpush1.bf16.msra.mxu0 %v1002
    %1470 = vmatprep.subr.bf16.mxu0 %v1007
    %1471 = vmatpush1.bf16.msra.mxu0 %v1006
    %1472 = vmatprep.subr.bf16.mxu0 %v1011
    %1473 = vmatpush1.bf16.msra.mxu0 %v1010
    %1474 = vmatprep.subr.bf16.mxu0 %v1015
    %1475 = vmatpush1.bf16.msra.mxu0 %v1014
    %1476 = vmatprep.mubr.bf16.mxu0 %v303
    %1477 = vmatmul.mubr.bf16.gmra.mrb[0].mxu0 %v302
    %v1478 = vpop.f32.mrb[0].mxu0
    %v1479 = vadd.f32 %v1436, %v1478
    %v1480 = vpop.f32.mrb[0].mxu0
    %v1481 = vadd.f32 %v1438, %v1480
    %v1482 = vpop.f32.mrb[0].mxu0
    %v1483 = vadd.f32 %v1440, %v1482
    %v1484 = vpop.f32.mrb[0].mxu0
    %v1485 = vadd.f32 %v1442, %v1484
    %1486 = vdwg.mxu0
    %1487 = vmatprep.subr.bf16.mxu0 %v1019
    %1488 = vmatpush1.bf16.msra.mxu0 %v1018
    %1489 = vmatprep.subr.bf16.mxu0 %v1023
    %1490 = vmatpush1.bf16.msra.mxu0 %v1022
    %1491 = vmatprep.subr.bf16.mxu0 %v1027
    %1492 = vmatpush1.bf16.msra.mxu0 %v1026
    %1493 = vmatprep.subr.bf16.mxu0 %v1031
    %1494 = vmatpush1.bf16.msra.mxu0 %v1030
    %1495 = vmatprep.subr.bf16.mxu0 %v1035
    %1496 = vmatpush1.bf16.msra.mxu0 %v1034
    %1497 = vmatprep.subr.bf16.mxu0 %v1039
    %1498 = vmatpush1.bf16.msra.mxu0 %v1038
    %1499 = vmatprep.subr.bf16.mxu0 %v1043
    %1500 = vmatpush1.bf16.msra.mxu0 %v1042
    %1501 = vmatprep.subr.bf16.mxu0 %v1047
    %1502 = vmatpush1.bf16.msra.mxu0 %v1046
    %1503 = vmatprep.subr.bf16.mxu0 %v1051
    %1504 = vmatpush1.bf16.msra.mxu0 %v1050
    %1505 = vmatprep.subr.bf16.mxu0 %v1055
    %1506 = vmatpush1.bf16.msra.mxu0 %v1054
    %1507 = vmatprep.subr.bf16.mxu0 %v1059
    %1508 = vmatpush1.bf16.msra.mxu0 %v1058
    %1509 = vmatprep.subr.bf16.mxu0 %v1063
    %1510 = vmatpush1.bf16.msra.mxu0 %v1062
    %1511 = vmatprep.subr.bf16.mxu0 %v1067
    %1512 = vmatpush1.bf16.msra.mxu0 %v1066
    %1513 = vmatprep.subr.bf16.mxu0 %v1071
    %1514 = vmatpush1.bf16.msra.mxu0 %v1070
    %1515 = vmatprep.subr.bf16.mxu0 %v1075
    %1516 = vmatpush1.bf16.msra.mxu0 %v1074
    %1517 = vmatprep.subr.bf16.mxu0 %v1079
    %1518 = vmatpush1.bf16.msra.mxu0 %v1078
    %1519 = vmatprep.mubr.bf16.mxu0 %v305
    %1520 = vmatmul.mubr.bf16.gmra.mrb[0].mxu0 %v304
    %v1521 = vpop.f32.mrb[0].mxu0
    %v1522 = vadd.f32 %v1479, %v1521
    %v1523 = vpop.f32.mrb[0].mxu0
    %v1524 = vadd.f32 %v1481, %v1523
    %v1525 = vpop.f32.mrb[0].mxu0
    %v1526 = vadd.f32 %v1483, %v1525
    %v1527 = vpop.f32.mrb[0].mxu0
    %v1528 = vadd.f32 %v1485, %v1527
    %1529 = vdwg.mxu0
    %v1530 = vmax.f32 %v1393, 0.0
    %v1531 = vmax.f32 %v1395, 0.0
    %v1532 = vmax.f32 %v1522, 0.0
    %v1533 = vmax.f32 %v1524, 0.0
    %v1534 = vmax.f32 %v1397, 0.0
    %v1535 = vmax.f32 %v1399, 0.0
    %v1536 = vmax.f32 %v1526, 0.0
    %v1537 = vmax.f32 %v1528, 0.0
    %v1538 = vld [vmem:[#allocation7] sm:$0xff]
    %v1539 = vld [vmem:[#allocation7 + $0x8] sm:$0xff]
    %v1540 = vld [vmem:[#allocation7 + $0x10] sm:$0xff]
    %v1541 = vld [vmem:[#allocation7 + $0x18] sm:$0xff]
    %v1542 = vld [vmem:[#allocation7 + $0x20] sm:$0xff]
    %v1543 = vld [vmem:[#allocation7 + $0x28] sm:$0xff]
    %v1544 = vld [vmem:[#allocation7 + $0x30] sm:$0xff]
    %v1545 = vld [vmem:[#allocation7 + $0x38] sm:$0xff]
    %v1546 = vld [vmem:[#allocation7 + $0x40] sm:$0xff]
    %v1547 = vld [vmem:[#allocation7 + $0x48] sm:$0xff]
    %v1548 = vld [vmem:[#allocation7 + $0x50] sm:$0xff]
    %v1549 = vld [vmem:[#allocation7 + $0x58] sm:$0xff]
    %v1550 = vld [vmem:[#allocation7 + $0x60] sm:$0xff]
    %v1551 = vld [vmem:[#allocation7 + $0x68] sm:$0xff]
    %v1552 = vld [vmem:[#allocation7 + $0x70] sm:$0xff]
    %v1553 = vld [vmem:[#allocation7 + $0x78] sm:$0xff]
    %v1554 = vld [vmem:[#allocation7 + $0x80] sm:$0xff]
    %v1555 = vld [vmem:[#allocation7 + $0x88] sm:$0xff]
    %v1556 = vld [vmem:[#allocation7 + $0x90] sm:$0xff]
    %v1557 = vld [vmem:[#allocation7 + $0x98] sm:$0xff]
    %v1558 = vld [vmem:[#allocation7 + $0xa0] sm:$0xff]
    %v1559 = vld [vmem:[#allocation7 + $0xa8] sm:$0xff]
    %v1560 = vld [vmem:[#allocation7 + $0xb0] sm:$0xff]
    %v1561 = vld [vmem:[#allocation7 + $0xb8] sm:$0xff]
    %v1562 = vld [vmem:[#allocation7 + $0xc0] sm:$0xff]
    %v1563 = vld [vmem:[#allocation7 + $0xc8] sm:$0xff]
    %v1564 = vld [vmem:[#allocation7 + $0xd0] sm:$0xff]
    %v1565 = vld [vmem:[#allocation7 + $0xd8] sm:$0xff]
    %v1566 = vld [vmem:[#allocation7 + $0xe0] sm:$0xff]
    %v1567 = vld [vmem:[#allocation7 + $0xe8] sm:$0xff]
    %v1568 = vld [vmem:[#allocation7 + $0xf0] sm:$0xff]
    %v1569 = vld [vmem:[#allocation7 + $0xf8] sm:$0xff]
    %v1570 = vld [vmem:[#allocation7 + $0x100] sm:$0xff]
    %v1571 = vld [vmem:[#allocation7 + $0x108] sm:$0xff]
    %v1572 = vld [vmem:[#allocation7 + $0x110] sm:$0xff]
    %v1573 = vld [vmem:[#allocation7 + $0x118] sm:$0xff]
    %v1574 = vld [vmem:[#allocation7 + $0x120] sm:$0xff]
    %v1575 = vld [vmem:[#allocation7 + $0x128] sm:$0xff]
    %v1576 = vld [vmem:[#allocation7 + $0x130] sm:$0xff]
    %v1577 = vld [vmem:[#allocation7 + $0x138] sm:$0xff]
    %v1578 = vld [vmem:[#allocation7 + $0x140] sm:$0xff]
    %v1579 = vld [vmem:[#allocation7 + $0x148] sm:$0xff]
    %v1580 = vld [vmem:[#allocation7 + $0x150] sm:$0xff]
    %v1581 = vld [vmem:[#allocation7 + $0x158] sm:$0xff]
    %v1582 = vld [vmem:[#allocation7 + $0x160] sm:$0xff]
    %v1583 = vld [vmem:[#allocation7 + $0x168] sm:$0xff]
    %v1584 = vld [vmem:[#allocation7 + $0x170] sm:$0xff]
    %v1585 = vld [vmem:[#allocation7 + $0x178] sm:$0xff]
    %v1586 = vld [vmem:[#allocation7 + $0x180] sm:$0xff]
    %v1587 = vld [vmem:[#allocation7 + $0x188] sm:$0xff]
    %v1588 = vld [vmem:[#allocation7 + $0x190] sm:$0xff]
    %v1589 = vld [vmem:[#allocation7 + $0x198] sm:$0xff]
    %v1590 = vld [vmem:[#allocation7 + $0x1a0] sm:$0xff]
    %v1591 = vld [vmem:[#allocation7 + $0x1a8] sm:$0xff]
    %v1592 = vld [vmem:[#allocation7 + $0x1b0] sm:$0xff]
    %v1593 = vld [vmem:[#allocation7 + $0x1b8] sm:$0xff]
    %v1594 = vld [vmem:[#allocation7 + $0x1c0] sm:$0xff]
    %v1595 = vld [vmem:[#allocation7 + $0x1c8] sm:$0xff]
    %v1596 = vld [vmem:[#allocation7 + $0x1d0] sm:$0xff]
    %v1597 = vld [vmem:[#allocation7 + $0x1d8] sm:$0xff]
    %v1598 = vld [vmem:[#allocation7 + $0x1e0] sm:$0xff]
    %v1599 = vld [vmem:[#allocation7 + $0x1e8] sm:$0xff]
    %v1600 = vld [vmem:[#allocation7 + $0x1f0] sm:$0xff]
    %v1601 = vld [vmem:[#allocation7 + $0x1f8] sm:$0xff]
    %v1602 = vld [vmem:[%s4] sm:$0x1]
    %v1604 = vlaneseq
    %v1605 = vshrl.u32 %v1604, 7
    %v1606 = vsub.s32 0, %v1605
    %v1607 = vrot.slane %v1602, %v1606
    %1609 = vmatprep.subr.mxu0 0.0
    %1610 = vmatpush1.msra.mxu0 %v1538
    %1611 = vmatprep.subr.mxu0 0.0
    %1612 = vmatpush1.msra.mxu0 %v1539
    %1613 = vmatprep.subr.mxu0 0.0
    %1614 = vmatpush1.msra.mxu0 %v1540
    %1615 = vmatprep.subr.mxu0 0.0
    %1616 = vmatpush1.msra.mxu0 %v1541
    %1617 = vmatprep.subr.mxu0 0.0
    %1618 = vmatpush1.msra.mxu0 %v1542
    %1619 = vmatprep.subr.mxu0 0.0
    %1620 = vmatpush1.msra.mxu0 %v1543
    %1621 = vmatprep.subr.mxu0 0.0
    %1622 = vmatpush1.msra.mxu0 %v1544
    %1623 = vmatprep.subr.mxu0 0.0
    %1624 = vmatpush1.msra.mxu0 %v1545
    %1625 = vmatprep.subr.mxu0 0.0
    %1626 = vmatpush1.msra.mxu0 %v1546
    %1627 = vmatprep.subr.mxu0 0.0
    %1628 = vmatpush1.msra.mxu0 %v1547
    %1629 = vmatprep.subr.mxu0 0.0
    %1630 = vmatpush1.msra.mxu0 %v1548
    %1631 = vmatprep.subr.mxu0 0.0
    %1632 = vmatpush1.msra.mxu0 %v1549
    %1633 = vmatprep.subr.mxu0 0.0
    %1634 = vmatpush1.msra.mxu0 %v1550
    %1635 = vmatprep.subr.mxu0 0.0
    %1636 = vmatpush1.msra.mxu0 %v1551
    %1637 = vmatprep.subr.mxu0 0.0
    %1638 = vmatpush1.msra.mxu0 %v1552
    %1639 = vmatprep.subr.mxu0 0.0
    %1640 = vmatpush1.msra.mxu0 %v1553
    %1641 = vmatprep.subr.mxu0 0.0
    %1642 = vmatpush1.msra.mxu0 %v1554
    %1643 = vmatprep.subr.mxu0 0.0
    %1644 = vmatpush1.msra.mxu0 %v1555
    %1645 = vmatprep.subr.mxu0 0.0
    %1646 = vmatpush1.msra.mxu0 %v1556
    %1647 = vmatprep.subr.mxu0 0.0
    %1648 = vmatpush1.msra.mxu0 %v1557
    %1649 = vmatprep.subr.mxu0 0.0
    %1650 = vmatpush1.msra.mxu0 %v1558
    %1651 = vmatprep.subr.mxu0 0.0
    %1652 = vmatpush1.msra.mxu0 %v1559
    %1653 = vmatprep.subr.mxu0 0.0
    %1654 = vmatpush1.msra.mxu0 %v1560
    %1655 = vmatprep.subr.mxu0 0.0
    %1656 = vmatpush1.msra.mxu0 %v1561
    %1657 = vmatprep.subr.mxu0 0.0
    %1658 = vmatpush1.msra.mxu0 %v1562
    %1659 = vmatprep.subr.mxu0 0.0
    %1660 = vmatpush1.msra.mxu0 %v1563
    %1661 = vmatprep.subr.mxu0 0.0
    %1662 = vmatpush1.msra.mxu0 %v1564
    %1663 = vmatprep.subr.mxu0 0.0
    %1664 = vmatpush1.msra.mxu0 %v1565
    %1665 = vmatprep.subr.mxu0 0.0
    %1666 = vmatpush1.msra.mxu0 %v1566
    %1667 = vmatprep.subr.mxu0 0.0
    %1668 = vmatpush1.msra.mxu0 %v1567
    %1669 = vmatprep.subr.mxu0 0.0
    %1670 = vmatpush1.msra.mxu0 %v1568
    %1671 = vmatprep.subr.mxu0 0.0
    %1672 = vmatpush1.msra.mxu0 %v1569
    %1673 = vmatprep.mubr.f32.mxu0 %v1531
    %1674 = vmatmul.mubr.f32.gmra.mrb[0].mxu0 %v1530
    %v1675 = vpop.f32.mrb[0].mxu0
    %v1676 = vadd.f32 %v1607, %v1675
    %v1677 = vpop.f32.mrb[0].mxu0
    %1678 = vmatprep.mubr.f32.mxu0 %v1535
    %1679 = vmatmul.mubr.f32.gmra.mrb[0].mxu0 %v1534
    %v1680 = vpop.f32.mrb[0].mxu0
    %v1681 = vadd.f32 %v1607, %v1680
    %v1682 = vpop.f32.mrb[0].mxu0
    %1683 = vdwg.mxu0
    %1684 = vmatprep.subr.mxu0 0.0
    %1685 = vmatpush1.msra.mxu0 %v1570
    %1686 = vmatprep.subr.mxu0 0.0
    %1687 = vmatpush1.msra.mxu0 %v1571
    %1688 = vmatprep.subr.mxu0 0.0
    %1689 = vmatpush1.msra.mxu0 %v1572
    %1690 = vmatprep.subr.mxu0 0.0
    %1691 = vmatpush1.msra.mxu0 %v1573
    %1692 = vmatprep.subr.mxu0 0.0
    %1693 = vmatpush1.msra.mxu0 %v1574
    %1694 = vmatprep.subr.mxu0 0.0
    %1695 = vmatpush1.msra.mxu0 %v1575
    %1696 = vmatprep.subr.mxu0 0.0
    %1697 = vmatpush1.msra.mxu0 %v1576
    %1698 = vmatprep.subr.mxu0 0.0
    %1699 = vmatpush1.msra.mxu0 %v1577
    %1700 = vmatprep.subr.mxu0 0.0
    %1701 = vmatpush1.msra.mxu0 %v1578
    %1702 = vmatprep.subr.mxu0 0.0
    %1703 = vmatpush1.msra.mxu0 %v1579
    %1704 = vmatprep.subr.mxu0 0.0
    %1705 = vmatpush1.msra.mxu0 %v1580
    %1706 = vmatprep.subr.mxu0 0.0
    %1707 = vmatpush1.msra.mxu0 %v1581
    %1708 = vmatprep.subr.mxu0 0.0
    %1709 = vmatpush1.msra.mxu0 %v1582
    %1710 = vmatprep.subr.mxu0 0.0
    %1711 = vmatpush1.msra.mxu0 %v1583
    %1712 = vmatprep.subr.mxu0 0.0
    %1713 = vmatpush1.msra.mxu0 %v1584
    %1714 = vmatprep.subr.mxu0 0.0
    %1715 = vmatpush1.msra.mxu0 %v1585
    %1716 = vmatprep.subr.mxu0 0.0
    %1717 = vmatpush1.msra.mxu0 %v1586
    %1718 = vmatprep.subr.mxu0 0.0
    %1719 = vmatpush1.msra.mxu0 %v1587
    %1720 = vmatprep.subr.mxu0 0.0
    %1721 = vmatpush1.msra.mxu0 %v1588
    %1722 = vmatprep.subr.mxu0 0.0
    %1723 = vmatpush1.msra.mxu0 %v1589
    %1724 = vmatprep.subr.mxu0 0.0
    %1725 = vmatpush1.msra.mxu0 %v1590
    %1726 = vmatprep.subr.mxu0 0.0
    %1727 = vmatpush1.msra.mxu0 %v1591
    %1728 = vmatprep.subr.mxu0 0.0
    %1729 = vmatpush1.msra.mxu0 %v1592
    %1730 = vmatprep.subr.mxu0 0.0
    %1731 = vmatpush1.msra.mxu0 %v1593
    %1732 = vmatprep.subr.mxu0 0.0
    %1733 = vmatpush1.msra.mxu0 %v1594
    %1734 = vmatprep.subr.mxu0 0.0
    %1735 = vmatpush1.msra.mxu0 %v1595
    %1736 = vmatprep.subr.mxu0 0.0
    %1737 = vmatpush1.msra.mxu0 %v1596
    %1738 = vmatprep.subr.mxu0 0.0
    %1739 = vmatpush1.msra.mxu0 %v1597
    %1740 = vmatprep.subr.mxu0 0.0
    %1741 = vmatpush1.msra.mxu0 %v1598
    %1742 = vmatprep.subr.mxu0 0.0
    %1743 = vmatpush1.msra.mxu0 %v1599
    %1744 = vmatprep.subr.mxu0 0.0
    %1745 = vmatpush1.msra.mxu0 %v1600
    %1746 = vmatprep.subr.mxu0 0.0
    %1747 = vmatpush1.msra.mxu0 %v1601
    %1748 = vmatprep.mubr.f32.mxu0 %v1533
    %1749 = vmatmul.mubr.f32.gmra.mrb[0].mxu0 %v1532
    %v1750 = vpop.f32.mrb[0].mxu0
    %v1751 = vadd.f32 %v1676, %v1750
    %v1752 = vpop.f32.mrb[0].mxu0
    %1753 = vmatprep.mubr.f32.mxu0 %v1537
    %1754 = vmatmul.mubr.f32.gmra.mrb[0].mxu0 %v1536
    %v1755 = vpop.f32.mrb[0].mxu0
    %v1756 = vadd.f32 %v1681, %v1755
    %v1757 = vpop.f32.mrb[0].mxu0
    %1758 = vdwg.mxu0
    %1759 = vst [vmem:[#allocation8] sm:$0xff] %v1751
    %1760 = vst [vmem:[#allocation8 + $0x8] sm:$0xff] %v1756
    // Predicated region
    $region34: #{tpu_custom_call.1} parent=1 // pred_check
      _
    $region35: #{tpu_custom_call.1} parent=1 // pred_check_branch
      %1762 = sbr.rel (0) target = $region37
    $region36: #{tpu_custom_call.1} parent=1 // pred_region
      %s1764 = ssub.s32 256, 256
      %1765 = vsyncadd [#allocation4], %s1764
      %s1766 = sshll.u32 [#allocation8], 4
      %s1767 = int_to_ptr.vmem [resolvable:$true] %s1766
      %1772 = dma.vmem_to_hbm [thread:$0]  %s1767, 256, %s5, [#allocation4], 128, 128, 8
    $region37: #{tpu_custom_call.1} parent=1 // pred_fallthru
      _
    // Predicated region
    $region38: #{tpu_custom_call.1} parent=1 // pred_check
      _
    $region39: #{tpu_custom_call.1} parent=1 // pred_check_branch
      %1774 = sbr.rel (0) target = $region41
    $region40: #{tpu_custom_call.1} parent=1 // pred_region
      %1775 = dma.done [#allocation4], 256
    $region41: #{tpu_custom_call.1} parent=1 // pred_fallthru
      _
    %1776 = vsyncpa [#allocation3], 1
    %1777 = vsyncpa [#allocation6], 1
    %1778 = vsyncpa [#allocation4], 1

</llo_original>
